<compile_context>
chip_gen: v7x
topology: tpu7x:2x2x1
jax: 0.10.0
libtpu: 0.0.40
codegen_flags: <defaults>
</compile_context>

<pallas_src>
import functools
import math

import jax
import jax.numpy as jnp
from jax.experimental import pallas as pl
from jax.experimental.pallas import tpu as pltpu


# ----------------------------- hardware-derived knobs -------------------------

@functools.lru_cache(maxsize=None)
def _vmem_limit_bytes():
    """Scoped-VMEM limit with headroom (48 MiB on v7x, 96 MiB on v5e/v6e)."""
    cap = 64 * 1024 * 1024          # most conservative physical VMEM (v7x / TC)
    try:
        cap = int(pltpu.get_tpu_info().vmem_capacity_bytes)
    except Exception:               # pragma: no cover - older builds / interpret
        pass
    return (cap * 3) // 4           # leave ~25% for Mosaic internal scratch


def _default_row_tile(weight_dtype):
    # 512-row tiles sit near the HBM roofline on mem-bound steps (v5e/v6e,
    # 128 MiB VMEM).  On v7x (64 MiB / TensorCore) keep 256 for the f32 path
    # so the resident QKV weight + double buffers leave headroom.
    small_vmem = _vmem_limit_bytes() < 96 * 1024 * 1024
    f32_path = jnp.dtype(weight_dtype).itemsize >= 4
    return 256 if (small_vmem and f32_path) else 512


def _inter_tile(i_dim):
    # Intermediate-dim tile: multiple of 128 that divides I (avoids padded
    # partial blocks polluting the accumulator), else the full dimension.
    for cand in (512, 256, 128):
        if i_dim % cand == 0:
            return cand
    return i_dim


def _row_tile(m, tm):
    return m if m <= tm else tm


def _compiler_params(dims):
    return pltpu.CompilerParams(dimension_semantics=dims,
                                vmem_limit_bytes=_vmem_limit_bytes())


def _resident_spec(shape):
    """BlockSpec for an operand whose block is identical at every grid step."""
    zeros = (0,) * len(shape)
    return pl.BlockSpec(shape, lambda *_: zeros)


# ----------------------------- in-kernel math helpers --------------------------

def _fast_recip(x):
    # EUP approximate reciprocal + one Newton-Raphson step: keeps the divide
    # off the VALU slot (perf feedback) while retaining ~f32 accuracy.
    r = pl.reciprocal(x, approx=True)
    return r * (2.0 - x * r)


def _gelu_exact(x):
    # Exact (erf-based) GELU matching torch.nn.functional.gelu's default.
    # erf via Abramowitz & Stegun 7.1.26 (|err| <= 1.5e-7): mul/add/exp plus an
    # EUP reciprocal, so the epilogue stays off the VALU divide path.
    a1, a2, a3, a4, a5 = (0.254829592, -0.284496736, 1.421413741,
                          -1.453152027, 1.061405429)
    p = 0.3275911
    z = x * 0.7071067811865476
    sgn = jnp.where(z < 0.0, -1.0, 1.0)
    az = jnp.abs(z)
    t = _fast_recip(1.0 + p * az)
    poly = ((((a5 * t + a4) * t + a3) * t + a2) * t + a1) * t
    erf = sgn * (1.0 - poly * jnp.exp(-az * az))
    return 0.5 * x * (1.0 + erf)


def _layernorm_f32(x_f32, g, b, eps):
    mean = jnp.mean(x_f32, axis=-1, keepdims=True)
    xc = x_f32 - mean
    var = jnp.mean(xc * xc, axis=-1, keepdims=True)
    return xc * jax.lax.rsqrt(var + eps) * g + b


# ----------------------------- kernel bodies ----------------------------------

def _ln_qkv_kernel(x_ref, g_ref, b_ref, w_ref, bias_ref, q_ref, k_ref, v_ref,
                   *, eps):
    """LayerNorm fused with the fused-QKV matmul.  x[tm,H] @ w[H,3H] + b."""
    x = x_ref[...].astype(jnp.float32)
    xn = _layernorm_f32(x, g_ref[...], b_ref[...], eps)
    acc = jnp.dot(xn.astype(w_ref.dtype), w_ref[...],
                  preferred_element_type=jnp.float32)
    acc = acc + bias_ref[...]
    h = q_ref.shape[-1]
    q_ref[...] = acc[:, :h].astype(q_ref.dtype)
    k_ref[...] = acc[:, h:2 * h].astype(k_ref.dtype)
    v_ref[...] = acc[:, 2 * h:].astype(v_ref.dtype)


def _attention_kernel(q_ref, k_ref, v_ref, o_ref, *, num_heads, head_dim, scale):
    """SDPA for one (batch, query-tile); heads split with in-VMEM slices."""
    q = q_ref[...]                       # (tq, H)
    k = k_ref[...]                       # (S,  H)
    v = v_ref[...]                       # (S,  H)
    ctx_cols = []
    for hh in range(num_heads):          # static head loop, disjoint columns
        lo = hh * head_dim
        qh = q[:, lo:lo + head_dim]
        kh = k[:, lo:lo + head_dim]
        vh = v[:, lo:lo + head_dim]
        s = jax.lax.dot_general(         # Q @ K^T -> (tq, S), f32 accumulate
            qh, kh, dimension_numbers=(((1,), (1,)), ((), ())),
            preferred_element_type=jnp.float32) * scale
        s = s - jnp.max(s, axis=-1, keepdims=True)
        # TODO(synk): on v6e/v7x the exp input could be cast to bf16 (EUP bf16
        # path); kept f32 for v5e portability and accuracy.
        e = jnp.exp(s)
        p = e * _fast_recip(jnp.sum(e, axis=-1, keepdims=True))
        ctx_cols.append(jnp.dot(p.astype(vh.dtype), vh,
                                preferred_element_type=jnp.float32))
    # Single lane-dense [tq, H] store (no masked partial stores per head).
    o_ref[...] = jnp.concatenate(ctx_cols, axis=-1).astype(o_ref.dtype)


def _proj_residual_kernel(x_ref, w_ref, b_ref, r_ref, o_ref):
    """ctx[tm,H] @ w[H,H] + b + residual."""
    acc = jnp.dot(x_ref[...], w_ref[...], preferred_element_type=jnp.float32)
    o_ref[...] = (acc + b_ref[...] + r_ref[...].astype(jnp.float32)
                  ).astype(o_ref.dtype)


def _ln_mlp_kernel(x_ref, g_ref, b_ref, w1_ref, b1_ref, w2_ref, b2_ref, o_ref,
                   xn_ref, acc_ref, *, eps):
    """y + W2 @ GELU(W1 @ LN(y) + b1) + b2, intermediate tiled & kept in VMEM."""
    j = pl.program_id(1)

    @pl.when(j == 0)
    def _():
        x = x_ref[...].astype(jnp.float32)
        xn_ref[...] = _layernorm_f32(x, g_ref[...], b_ref[...],
                                     eps).astype(xn_ref.dtype)
        acc_ref[...] = jnp.zeros_like(acc_ref)

    inter = jnp.dot(xn_ref[...], w1_ref[...],                 # (tm, ti)
                    preferred_element_type=jnp.float32)
    inter = _gelu_exact(inter + b1_ref[...])
    acc_ref[...] += jnp.dot(inter.astype(w2_ref.dtype), w2_ref[...],
                            preferred_element_type=jnp.float32)

    @pl.when(j == pl.num_programs(1) - 1)
    def _():
        out = acc_ref[...] + b2_ref[...] + x_ref[...].astype(jnp.float32)
        o_ref[...] = out.astype(o_ref.dtype)


# ----------------------------- pallas_call wrappers ----------------------------

def _ln_qkv(x2, g, bvec, w, bias, *, eps, tm, out_dtype):
    m, h = x2.shape
    n3 = w.shape[1]
    tm = _row_tile(m, tm)
    out_sds = jax.ShapeDtypeStruct((m, h), out_dtype)
    cost = pl.CostEstimate(
        flops=2 * m * h * n3,
        transcendentals=m,
        bytes_accessed=int(x2.size * x2.dtype.itemsize
                           + w.size * w.dtype.itemsize + bias.size * 4
                           + 2 * g.size * 4
                           + 3 * m * h * jnp.dtype(out_dtype).itemsize))
    return pl.pallas_call(
        functools.partial(_ln_qkv_kernel, eps=eps),
        out_shape=(out_sds, out_sds, out_sds),
        grid=(pl.cdiv(m, tm),),
        in_specs=[pl.BlockSpec((tm, h), lambda i: (i, 0)),
                  _resident_spec((1, h)),
                  _resident_spec((1, h)),
                  _resident_spec((h, n3)),
                  _resident_spec((1, n3))],
        out_specs=(pl.BlockSpec((tm, h), lambda i: (i, 0)),
                   pl.BlockSpec((tm, h), lambda i: (i, 0)),
                   pl.BlockSpec((tm, h), lambda i: (i, 0))),
        compiler_params=_compiler_params(("parallel",)),
        cost_estimate=cost,
    )(x2, g, bvec, w, bias)


def _attention(q, k, v, *, num_heads, head_dim, scale, tq):
    b, s, h = q.shape
    cost = pl.CostEstimate(
        flops=4 * b * s * s * h,
        transcendentals=b * num_heads * s * s,
        bytes_accessed=int(4 * b * s * h * q.dtype.itemsize))
    q_spec = pl.BlockSpec((None, tq, h), lambda bb, qi: (bb, qi, 0))
    kv_spec = pl.BlockSpec((None, s, h), lambda bb, qi: (bb, 0, 0))
    return pl.pallas_call(
        functools.partial(_attention_kernel, num_heads=num_heads,
                          head_dim=head_dim, scale=scale),
        out_shape=jax.ShapeDtypeStruct((b, s, h), q.dtype),
        grid=(b, pl.cdiv(s, tq)),
        in_specs=[q_spec, kv_spec, kv_spec],
        out_specs=pl.BlockSpec((None, tq, h), lambda bb, qi: (bb, qi, 0)),
        compiler_params=_compiler_params(("parallel", "parallel")),
        cost_estimate=cost,
    )(q, k, v)


def _proj_residual(x2, w, bias, residual, *, tm):
    m, kk = x2.shape
    n = w.shape[1]
    out_dtype = residual.dtype
    tm = _row_tile(m, tm)
    # Alias the (kernel-owned) ctx buffer to the output when layouts match.
    io_alias = {0: 0} if (x2.dtype == out_dtype and kk == n) else {}
    cost = pl.CostEstimate(
        flops=2 * m * kk * n,
        transcendentals=0,
        bytes_accessed=int(x2.size * x2.dtype.itemsize
                           + w.size * w.dtype.itemsize + bias.size * 4
                           + residual.size * residual.dtype.itemsize
                           + m * n * jnp.dtype(out_dtype).itemsize))
    return pl.pallas_call(
        _proj_residual_kernel,
        out_shape=jax.ShapeDtypeStruct((m, n), out_dtype),
        grid=(pl.cdiv(m, tm),),
        in_specs=[pl.BlockSpec((tm, kk), lambda i: (i, 0)),
                  _resident_spec((kk, n)),
                  _resident_spec((1, n)),
                  pl.BlockSpec((tm, n), lambda i: (i, 0))],
        out_specs=pl.BlockSpec((tm, n), lambda i: (i, 0)),
        input_output_aliases=io_alias,
        compiler_params=_compiler_params(("parallel",)),
        cost_estimate=cost,
    )(x2, w, bias, residual)


def _ln_mlp(x2, g, bvec, w1, b1, w2, b2, *, eps, tm, ti):
    m, h = x2.shape
    i_dim = w1.shape[1]
    tm = _row_tile(m, tm)
    out_dtype = x2.dtype
    cost = pl.CostEstimate(
        flops=4 * m * h * i_dim,
        transcendentals=2 * m * i_dim,
        bytes_accessed=int(2 * x2.size * x2.dtype.itemsize
                           + w1.size * w1.dtype.itemsize
                           + w2.size * w2.dtype.itemsize
                           + (b1.size + b2.size + 2 * g.size) * 4))
    return pl.pallas_call(
        functools.partial(_ln_mlp_kernel, eps=eps),
        out_shape=jax.ShapeDtypeStruct((m, h), out_dtype),
        grid=(pl.cdiv(m, tm), pl.cdiv(i_dim, ti)),
        in_specs=[pl.BlockSpec((tm, h), lambda i, j: (i, 0)),
                  _resident_spec((1, h)),
                  _resident_spec((1, h)),
                  pl.BlockSpec((h, ti), lambda i, j: (0, j)),
                  pl.BlockSpec((1, ti), lambda i, j: (0, j)),
                  pl.BlockSpec((ti, h), lambda i, j: (j, 0)),
                  _resident_spec((1, h))],
        out_specs=pl.BlockSpec((tm, h), lambda i, j: (i, 0)),
        scratch_shapes=[pltpu.VMEM((tm, h), w1.dtype),       # normalized x
                        pltpu.VMEM((tm, h), jnp.float32)],   # f32 accumulator
        input_output_aliases={0: 0},
        compiler_params=_compiler_params(("parallel", "arbitrary")),
        cost_estimate=cost,
    )(x2, g, bvec, w1, b1, w2, b2)


# ----------------------------- parameter preprocessing -------------------------

def prepare_params(params, *, compute_dtype=None):
    """One-time weight preprocessing (do at load time, NOT per forward call):
       * fuse q/k/v weights into a single [H, 3H] tensor (+ [3H] bias),
       * transpose every linear weight from PyTorch [out,in] to K-major [in,out]
         so the MXU contraction needs no per-step / per-call transpose,
       * optionally cast matmul weights to compute_dtype (e.g. bf16) once;
         biases / LayerNorm params stay f32.
    """
    wdt = compute_dtype if compute_dtype is not None else params["q_w"].dtype
    f32 = jnp.float32
    qkv_w = jnp.concatenate([params["q_w"], params["k_w"], params["v_w"]],
                            axis=0)                               # [3H, H]
    qkv_b = jnp.concatenate([params["q_b"], params["k_b"], params["v_b"]])
    return {
        "ln1_g": params["ln_before_w"].reshape(1, -1).astype(f32),
        "ln1_b": params["ln_before_b"].reshape(1, -1).astype(f32),
        "qkv_w": qkv_w.T.astype(wdt),                             # [H, 3H]
        "qkv_b": qkv_b.reshape(1, -1).astype(f32),
        "proj_w": params["attn_out_w"].T.astype(wdt),             # [H, H]
        "proj_b": params["attn_out_b"].reshape(1, -1).astype(f32),
        "ln2_g": params["ln_after_w"].reshape(1, -1).astype(f32),
        "ln2_b": params["ln_after_b"].reshape(1, -1).astype(f32),
        "w1": params["inter_w"].T.astype(wdt),                    # [H, I]
        "b1": params["inter_b"].reshape(1, -1).astype(f32),
        "w2": params["out_w"].T.astype(wdt),                      # [I, H]
        "b2": params["out_b"].reshape(1, -1).astype(f32),
    }


# ----------------------------- SSASTLayer forward -------------------------------

def ssast_layer(hidden_states, params, *, num_heads, eps=1e-12,
                tm=None, tq=None, ti=None):
    """SSASTLayer.forward (eval mode).  hidden_states: [B, S, H].
    `params` must come from prepare_params()."""
    b, s, h = hidden_states.shape
    assert h % num_heads == 0
    d = h // num_heads
    m = b * s
    w_dtype = params["qkv_w"].dtype
    if tm is None:
        tm = _default_row_tile(w_dtype)
    if tq is None:
        tq = s if s <= 1024 else 256            # cap [tq, S] softmax temporaries
    if ti is None:
        ti = _inter_tile(params["w1"].shape[1])

    x = hidden_states.reshape(m, h)

    # ---- attention block --------------------------------------------------
    q, k, v = _ln_qkv(x, params["ln1_g"], params["ln1_b"],
                      params["qkv_w"], params["qkv_b"],
                      eps=eps, tm=tm, out_dtype=w_dtype)
    ctx = _attention(q.reshape(b, s, h), k.reshape(b, s, h), v.reshape(b, s, h),
                     num_heads=num_heads, head_dim=d,
                     scale=1.0 / math.sqrt(d), tq=tq)
    y = _proj_residual(ctx.reshape(m, h), params["proj_w"], params["proj_b"],
                       x, tm=tm)

    # ---- MLP block ----------------------------------------------------------
    out = _ln_mlp(y, params["ln2_g"], params["ln2_b"],
                  params["w1"], params["b1"], params["w2"], params["b2"],
                  eps=eps, tm=tm, ti=ti)
    return out.reshape(b, s, h)


# ----------------------------- pure-JAX reference ------------------------------

def ssast_layer_ref(x, p, *, num_heads, eps=1e-12):
    hp = jax.lax.Precision.HIGHEST

    def ln(v, g, bb):
        mu = jnp.mean(v, axis=-1, keepdims=True)
        var = jnp.mean(jnp.square(v - mu), axis=-1, keepdims=True)
        return (v - mu) / jnp.sqrt(var + eps) * g + bb

    def lin(v, w, bb):
        return jnp.einsum("...i,oi->...o", v, w, precision=hp) + bb

    b, s, h = x.shape
    d = h // num_heads

    def heads(t):
        return t.reshape(b, s, num_heads, d).transpose(0, 2, 1, 3)

    h1 = ln(x, p["ln_before_w"], p["ln_before_b"])
    qh = heads(lin(h1, p["q_w"], p["q_b"]))
    kh = heads(lin(h1, p["k_w"], p["k_b"]))
    vh = heads(lin(h1, p["v_w"], p["v_b"]))
    scores = jnp.einsum("bhqd,bhkd->bhqk", qh, kh, precision=hp) / math.sqrt(d)
    probs = jax.nn.softmax(scores, axis=-1)
    ctx = jnp.einsum("bhqk,bhkd->bhqd", probs, vh, precision=hp)
    ctx = ctx.transpose(0, 2, 1, 3).reshape(b, s, h)
    attn_out = lin(ctx, p["attn_out_w"], p["attn_out_b"]) + x
    h2 = ln(attn_out, p["ln_after_w"], p["ln_after_b"])
    inter = jax.nn.gelu(lin(h2, p["inter_w"], p["inter_b"]), approximate=False)
    return lin(inter, p["out_w"], p["out_b"]) + attn_out


if __name__ == "__main__":
    # Small config: batch=2, seq=8, hidden=32, heads=4, intermediate=64.
    B, S, HID, NH, INTER = 2, 8, 32, 4, 64
    EPS = 1e-12

    key = jax.random.PRNGKey(0)
    keys = jax.random.split(key, 17)

    def w_init(kk, o, i):
        return 0.02 * jax.random.normal(kk, (o, i), jnp.float32)

    def b_init(kk, o):
        return 0.02 * jax.random.normal(kk, (o,), jnp.float32)

    params = {
        "ln_before_w": 1.0 + 0.1 * jax.random.normal(keys[0], (HID,), jnp.float32),
        "ln_before_b": 0.1 * jax.random.normal(keys[1], (HID,), jnp.float32),
        "q_w": w_init(keys[2], HID, HID), "q_b": b_init(keys[3], HID),
        "k_w": w_init(keys[4], HID, HID), "k_b": b_init(keys[5], HID),
        "v_w": w_init(keys[6], HID, HID), "v_b": b_init(keys[7], HID),
        "attn_out_w": w_init(keys[8], HID, HID), "attn_out_b": b_init(keys[9], HID),
        "ln_after_w": 1.0 + 0.1 * jax.random.normal(keys[10], (HID,), jnp.float32),
        "ln_after_b": 0.1 * jax.random.normal(keys[11], (HID,), jnp.float32),
        "inter_w": w_init(keys[12], INTER, HID), "inter_b": b_init(keys[13], INTER),
        "out_w": w_init(keys[14], HID, INTER), "out_b": b_init(keys[15], HID),
    }
    hidden_states = jax.random.normal(keys[16], (B, S, HID), jnp.float32)

    ref = ssast_layer_ref(hidden_states, params, num_heads=NH, eps=EPS)

    # f32 path.
    prepared_f32 = prepare_params(params)
    fwd_f32 = jax.jit(functools.partial(ssast_layer, num_heads=NH, eps=EPS))
    out = jax.block_until_ready(fwd_f32(hidden_states, prepared_f32))
    assert out.shape == (B, S, HID)
    assert jnp.allclose(out, ref, atol=5e-4, rtol=5e-4), (
        "f32 mismatch: max |err| = "
        f"{float(jnp.max(jnp.abs(out - ref))):.3e}")

    # bf16 matmul path (weights cast once at prep time, f32 accumulation).
    prepared_bf16 = prepare_params(params, compute_dtype=jnp.bfloat16)
    out_bf16 = jax.block_until_ready(fwd_f32(hidden_states, prepared_bf16))
    assert out_bf16.shape == (B, S, HID)
    assert jnp.allclose(out_bf16, ref, atol=5e-2, rtol=5e-2), (
        "bf16 mismatch: max |err| = "
        f"{float(jnp.max(jnp.abs(out_bf16 - ref))):.3e}")

    print("KERNEL_OK")
</pallas_src>

<mosaic_0001>
module attributes {stable_mosaic.version = 11 : i64} {
  func.func @_proj_residual_kernel(%arg0: i32, %arg1: memref<16x32xf32, #tpu.memory_space<vmem>>, %arg2: memref<32x32xf32, #tpu.memory_space<vmem>>, %arg3: memref<1x32xf32, #tpu.memory_space<vmem>>, %arg4: memref<16x32xf32, #tpu.memory_space<vmem>>, %arg5: memref<16x32xf32, #tpu.memory_space<vmem>>) attributes {dimension_semantics = [#tpu.dimension_semantics<parallel>], iteration_bounds = array<i64: 1>, scalar_prefetch = 0 : i64, scratch_operands = 0 : i64, tpu.core_type = #tpu.core_type<tc>, window_params = [{transform_indices = @transform_0, window_bounds = array<i64: 16, 32>}, {pipeline_mode = #tpu.pipeline_mode<synchronous>, transform_indices = @transform_1, window_bounds = array<i64: 32, 32>}, {pipeline_mode = #tpu.pipeline_mode<synchronous>, transform_indices = @transform_2, window_bounds = array<i64: 1, 32>}, {transform_indices = @transform_3, window_bounds = array<i64: 16, 32>}, {transform_indices = @transform_4, window_bounds = array<i64: 16, 32>}]} {
    %c0 = arith.constant 0 : index
    %c0_0 = arith.constant 0 : index
    %0 = vector.load %arg1[%c0, %c0_0] : memref<16x32xf32, #tpu.memory_space<vmem>>, vector<16x32xf32>
    %c0_1 = arith.constant 0 : index
    %c0_2 = arith.constant 0 : index
    %1 = vector.load %arg2[%c0_1, %c0_2] : memref<32x32xf32, #tpu.memory_space<vmem>>, vector<32x32xf32>
    %cst = arith.constant dense<0.000000e+00> : vector<16x32xf32>
    %2 = tpu.matmul %0, %1, %cst {dimension_numbers = #tpu.dot_dimension_numbers<[1], [0], [0], [1], [0, 0, 1, 1], [], []>} : vector<16x32xf32>, vector<32x32xf32>, vector<16x32xf32> -> vector<16x32xf32>
    %c0_3 = arith.constant 0 : index
    %c0_4 = arith.constant 0 : index
    %3 = vector.load %arg3[%c0_3, %c0_4] : memref<1x32xf32, #tpu.memory_space<vmem>>, vector<1x32xf32>
    %4 = vector.broadcast %3 : vector<1x32xf32> to vector<16x32xf32>
    %5 = arith.addf %2, %4 : vector<16x32xf32>
    %c0_5 = arith.constant 0 : index
    %c0_6 = arith.constant 0 : index
    %6 = vector.load %arg4[%c0_5, %c0_6] : memref<16x32xf32, #tpu.memory_space<vmem>>, vector<16x32xf32>
    %7 = arith.addf %5, %6 : vector<16x32xf32>
    %c0_7 = arith.constant 0 : index
    %c0_8 = arith.constant 0 : index
    %8 = vector.load %arg5[%c0_7, %c0_8] : memref<16x32xf32, #tpu.memory_space<vmem>>, vector<16x32xf32>
    tpu.vector_store %arg5[%c0_7, %c0_8], %7 {strides = array<i32>} : memref<16x32xf32, #tpu.memory_space<vmem>>, vector<16x32xf32>,
    return
  }
  func.func @transform_0(%arg0: i32) -> (i32, i32) {
    %c0_i32 = arith.constant 0 : i32
    %c0_i32_0 = arith.constant 0 : i32
    return %arg0, %c0_i32 : i32, i32
  }
  func.func @transform_1(%arg0: i32) -> (i32, i32) {
    %c0_i32 = arith.constant 0 : i32
    %c0_i32_0 = arith.constant 0 : i32
    %c0_i32_1 = arith.constant 0 : i32
    return %c0_i32, %c0_i32_0 : i32, i32
  }
  func.func @transform_2(%arg0: i32) -> (i32, i32) {
    %c0_i32 = arith.constant 0 : i32
    %c0_i32_0 = arith.constant 0 : i32
    %c0_i32_1 = arith.constant 0 : i32
    return %c0_i32, %c0_i32_0 : i32, i32
  }
  func.func @transform_3(%arg0: i32) -> (i32, i32) {
    %c0_i32 = arith.constant 0 : i32
    %c0_i32_0 = arith.constant 0 : i32
    return %arg0, %c0_i32 : i32, i32
  }
  func.func @transform_4(%arg0: i32) -> (i32, i32) {
    %c0_i32 = arith.constant 0 : i32
    %c0_i32_0 = arith.constant 0 : i32
    return %arg0, %c0_i32 : i32, i32
  }
}

module attributes {stable_mosaic.version = 11 : i64} {
  func.func @_ln_qkv_kernel(%arg0: i32, %arg1: memref<16x32xf32, #tpu.memory_space<vmem>>, %arg2: memref<1x32xf32, #tpu.memory_space<vmem>>, %arg3: memref<1x32xf32, #tpu.memory_space<vmem>>, %arg4: memref<32x96xf32, #tpu.memory_space<vmem>>, %arg5: memref<1x96xf32, #tpu.memory_space<vmem>>, %arg6: memref<16x32xf32, #tpu.memory_space<vmem>>, %arg7: memref<16x32xf32, #tpu.memory_space<vmem>>, %arg8: memref<16x32xf32, #tpu.memory_space<vmem>>) attributes {dimension_semantics = [#tpu.dimension_semantics<parallel>], iteration_bounds = array<i64: 1>, scalar_prefetch = 0 : i64, scratch_operands = 0 : i64, tpu.core_type = #tpu.core_type<tc>, window_params = [{transform_indices = @transform_0, window_bounds = array<i64: 16, 32>}, {pipeline_mode = #tpu.pipeline_mode<synchronous>, transform_indices = @transform_1, window_bounds = array<i64: 1, 32>}, {pipeline_mode = #tpu.pipeline_mode<synchronous>, transform_indices = @transform_2, window_bounds = array<i64: 1, 32>}, {pipeline_mode = #tpu.pipeline_mode<synchronous>, transform_indices = @transform_3, window_bounds = array<i64: 32, 96>}, {pipeline_mode = #tpu.pipeline_mode<synchronous>, transform_indices = @transform_4, window_bounds = array<i64: 1, 96>}, {transform_indices = @transform_5, window_bounds = array<i64: 16, 32>}, {transform_indices = @transform_6, window_bounds = array<i64: 16, 32>}, {transform_indices = @transform_7, window_bounds = array<i64: 16, 32>}]} {
    %c0 = arith.constant 0 : index
    %c0_0 = arith.constant 0 : index
    %0 = vector.load %arg1[%c0, %c0_0] : memref<16x32xf32, #tpu.memory_space<vmem>>, vector<16x32xf32>
    %c0_1 = arith.constant 0 : index
    %c0_2 = arith.constant 0 : index
    %1 = vector.load %arg2[%c0_1, %c0_2] : memref<1x32xf32, #tpu.memory_space<vmem>>, vector<1x32xf32>
    %c0_3 = arith.constant 0 : index
    %c0_4 = arith.constant 0 : index
    %2 = vector.load %arg3[%c0_3, %c0_4] : memref<1x32xf32, #tpu.memory_space<vmem>>, vector<1x32xf32>
    %cst = arith.constant dense<0.000000e+00> : vector<16xf32>
    %3 = vector.multi_reduction <add>, %0, %cst [1] : vector<16x32xf32> to vector<16xf32>
    %4 = vector.shape_cast %3 : vector<16xf32> to vector<16x1xf32>
    %cst_5 = arith.constant 3.200000e+01 : f32
    %5 = vector.broadcast %cst_5 : f32 to vector<16x1xf32>
    %6 = arith.divf %4, %5 : vector<16x1xf32>
    %7 = vector.broadcast %6 : vector<16x1xf32> to vector<16x32xf32>
    %8 = arith.subf %0, %7 : vector<16x32xf32>
    %9 = arith.mulf %8, %8 : vector<16x32xf32>
    %cst_6 = arith.constant dense<0.000000e+00> : vector<16xf32>
    %10 = vector.multi_reduction <add>, %9, %cst_6 [1] : vector<16x32xf32> to vector<16xf32>
    %11 = vector.shape_cast %10 : vector<16xf32> to vector<16x1xf32>
    %cst_7 = arith.constant 3.200000e+01 : f32
    %12 = vector.broadcast %cst_7 : f32 to vector<16x1xf32>
    %13 = arith.divf %11, %12 : vector<16x1xf32>
    %cst_8 = arith.constant 9.99999996E-13 : f32
    %14 = vector.broadcast %cst_8 : f32 to vector<16x1xf32>
    %15 = arith.addf %13, %14 : vector<16x1xf32>
    %16 = math.rsqrt %15 : vector<16x1xf32>
    %17 = vector.broadcast %16 : vector<16x1xf32> to vector<16x32xf32>
    %18 = arith.mulf %8, %17 : vector<16x32xf32>
    %19 = vector.broadcast %1 : vector<1x32xf32> to vector<16x32xf32>
    %20 = arith.mulf %18, %19 : vector<16x32xf32>
    %21 = vector.broadcast %2 : vector<1x32xf32> to vector<16x32xf32>
    %22 = arith.addf %20, %21 : vector<16x32xf32>
    %c0_9 = arith.constant 0 : index
    %c0_10 = arith.constant 0 : index
    %23 = vector.load %arg4[%c0_9, %c0_10] : memref<32x96xf32, #tpu.memory_space<vmem>>, vector<32x96xf32>
    %cst_11 = arith.constant dense<0.000000e+00> : vector<16x96xf32>
    %24 = tpu.matmul %22, %23, %cst_11 {dimension_numbers = #tpu.dot_dimension_numbers<[1], [0], [0], [1], [0, 0, 1, 1], [], []>} : vector<16x32xf32>, vector<32x96xf32>, vector<16x96xf32> -> vector<16x96xf32>
    %c0_12 = arith.constant 0 : index
    %c0_13 = arith.constant 0 : index
    %25 = vector.load %arg5[%c0_12, %c0_13] : memref<1x96xf32, #tpu.memory_space<vmem>>, vector<1x96xf32>
    %26 = vector.broadcast %25 : vector<1x96xf32> to vector<16x96xf32>
    %27 = arith.addf %24, %26 : vector<16x96xf32>
    %28 = vector.extract_strided_slice %27 {offsets = [0, 0], sizes = [16, 32], strides = [1, 1]} : vector<16x96xf32> to vector<16x32xf32>
    %c0_14 = arith.constant 0 : index
    %c0_15 = arith.constant 0 : index
    %29 = vector.load %arg6[%c0_14, %c0_15] : memref<16x32xf32, #tpu.memory_space<vmem>>, vector<16x32xf32>
    tpu.vector_store %arg6[%c0_14, %c0_15], %28 {strides = array<i32>} : memref<16x32xf32, #tpu.memory_space<vmem>>, vector<16x32xf32>,
    %30 = vector.extract_strided_slice %27 {offsets = [0, 32], sizes = [16, 32], strides = [1, 1]} : vector<16x96xf32> to vector<16x32xf32>
    %c0_16 = arith.constant 0 : index
    %c0_17 = arith.constant 0 : index
    %31 = vector.load %arg7[%c0_16, %c0_17] : memref<16x32xf32, #tpu.memory_space<vmem>>, vector<16x32xf32>
    tpu.vector_store %arg7[%c0_16, %c0_17], %30 {strides = array<i32>} : memref<16x32xf32, #tpu.memory_space<vmem>>, vector<16x32xf32>,
    %32 = vector.extract_strided_slice %27 {offsets = [0, 64], sizes = [16, 32], strides = [1, 1]} : vector<16x96xf32> to vector<16x32xf32>
    %c0_18 = arith.constant 0 : index
    %c0_19 = arith.constant 0 : index
    %33 = vector.load %arg8[%c0_18, %c0_19] : memref<16x32xf32, #tpu.memory_space<vmem>>, vector<16x32xf32>
    tpu.vector_store %arg8[%c0_18, %c0_19], %32 {strides = array<i32>} : memref<16x32xf32, #tpu.memory_space<vmem>>, vector<16x32xf32>,
    return
  }
  func.func @transform_0(%arg0: i32) -> (i32, i32) {
    %c0_i32 = arith.constant 0 : i32
    %c0_i32_0 = arith.constant 0 : i32
    return %arg0, %c0_i32 : i32, i32
  }
  func.func @transform_1(%arg0: i32) -> (i32, i32) {
    %c0_i32 = arith.constant 0 : i32
    %c0_i32_0 = arith.constant 0 : i32
    %c0_i32_1 = arith.constant 0 : i32
    return %c0_i32, %c0_i32_0 : i32, i32
  }
  func.func @transform_2(%arg0: i32) -> (i32, i32) {
    %c0_i32 = arith.constant 0 : i32
    %c0_i32_0 = arith.constant 0 : i32
    %c0_i32_1 = arith.constant 0 : i32
    return %c0_i32, %c0_i32_0 : i32, i32
  }
  func.func @transform_3(%arg0: i32) -> (i32, i32) {
    %c0_i32 = arith.constant 0 : i32
    %c0_i32_0 = arith.constant 0 : i32
    %c0_i32_1 = arith.constant 0 : i32
    return %c0_i32, %c0_i32_0 : i32, i32
  }
  func.func @transform_4(%arg0: i32) -> (i32, i32) {
    %c0_i32 = arith.constant 0 : i32
    %c0_i32_0 = arith.constant 0 : i32
    %c0_i32_1 = arith.constant 0 : i32
    return %c0_i32, %c0_i32_0 : i32, i32
  }
  func.func @transform_5(%arg0: i32) -> (i32, i32) {
    %c0_i32 = arith.constant 0 : i32
    %c0_i32_0 = arith.constant 0 : i32
    return %arg0, %c0_i32 : i32, i32
  }
  func.func @transform_6(%arg0: i32) -> (i32, i32) {
    %c0_i32 = arith.constant 0 : i32
    %c0_i32_0 = arith.constant 0 : i32
    return %arg0, %c0_i32 : i32, i32
  }
  func.func @transform_7(%arg0: i32) -> (i32, i32) {
    %c0_i32 = arith.constant 0 : i32
    %c0_i32_0 = arith.constant 0 : i32
    return %arg0, %c0_i32 : i32, i32
  }
}

module attributes {stable_mosaic.version = 11 : i64} {
  func.func @_attention_kernel(%arg0: i32, %arg1: i32, %arg2: memref<1x8x32xf32, #tpu.memory_space<vmem>>, %arg3: memref<1x8x32xf32, #tpu.memory_space<vmem>>, %arg4: memref<1x8x32xf32, #tpu.memory_space<vmem>>, %arg5: memref<1x8x32xf32, #tpu.memory_space<vmem>>) attributes {dimension_semantics = [#tpu.dimension_semantics<parallel>, #tpu.dimension_semantics<parallel>], iteration_bounds = array<i64: 2, 1>, scalar_prefetch = 0 : i64, scratch_operands = 0 : i64, tpu.core_type = #tpu.core_type<tc>, window_params = [{transform_indices = @transform_0, window_bounds = array<i64: 1, 8, 32>}, {transform_indices = @transform_1, window_bounds = array<i64: 1, 8, 32>}, {transform_indices = @transform_2, window_bounds = array<i64: 1, 8, 32>}, {transform_indices = @transform_3, window_bounds = array<i64: 1, 8, 32>}]} {
    %c0 = arith.constant 0 : index
    %c0_0 = arith.constant 0 : index
    %c0_1 = arith.constant 0 : index
    %0 = vector.load %arg2[%c0, %c0_0, %c0_1] : memref<1x8x32xf32, #tpu.memory_space<vmem>>, vector<1x8x32xf32>
    %1 = vector.shape_cast %0 : vector<1x8x32xf32> to vector<8x32xf32>
    %c0_2 = arith.constant 0 : index
    %c0_3 = arith.constant 0 : index
    %c0_4 = arith.constant 0 : index
    %2 = vector.load %arg3[%c0_2, %c0_3, %c0_4] : memref<1x8x32xf32, #tpu.memory_space<vmem>>, vector<1x8x32xf32>
    %3 = vector.shape_cast %2 : vector<1x8x32xf32> to vector<8x32xf32>
    %c0_5 = arith.constant 0 : index
    %c0_6 = arith.constant 0 : index
    %c0_7 = arith.constant 0 : index
    %4 = vector.load %arg4[%c0_5, %c0_6, %c0_7] : memref<1x8x32xf32, #tpu.memory_space<vmem>>, vector<1x8x32xf32>
    %5 = vector.shape_cast %4 : vector<1x8x32xf32> to vector<8x32xf32>
    %6 = vector.extract_strided_slice %1 {offsets = [0, 0], sizes = [8, 8], strides = [1, 1]} : vector<8x32xf32> to vector<8x8xf32>
    %7 = vector.extract_strided_slice %3 {offsets = [0, 0], sizes = [8, 8], strides = [1, 1]} : vector<8x32xf32> to vector<8x8xf32>
    %8 = vector.extract_strided_slice %5 {offsets = [0, 0], sizes = [8, 8], strides = [1, 1]} : vector<8x32xf32> to vector<8x8xf32>
    %cst = arith.constant dense<0.000000e+00> : vector<8x8xf32>
    %9 = tpu.matmul %6, %7, %cst {dimension_numbers = #tpu.dot_dimension_numbers<[1], [1], [0], [0], [0, 0, 1, 0], [], []>} : vector<8x8xf32>, vector<8x8xf32>, vector<8x8xf32> -> vector<8x8xf32>
    %cst_8 = arith.constant 0.353553385 : f32
    %10 = vector.broadcast %cst_8 : f32 to vector<8x8xf32>
    %11 = arith.mulf %9, %10 : vector<8x8xf32>
    %cst_9 = arith.constant dense<0xFF800000> : vector<8xf32>
    %12 = vector.multi_reduction <maximumf>, %11, %cst_9 [1] : vector<8x8xf32> to vector<8xf32>
    %13 = vector.shape_cast %12 : vector<8xf32> to vector<8x1xf32>
    %14 = vector.broadcast %13 : vector<8x1xf32> to vector<8x8xf32>
    %15 = arith.subf %11, %14 : vector<8x8xf32>
    %16 = math.exp %15 : vector<8x8xf32>
    %cst_10 = arith.constant dense<0.000000e+00> : vector<8xf32>
    %17 = vector.multi_reduction <add>, %16, %cst_10 [1] : vector<8x8xf32> to vector<8xf32>
    %18 = vector.shape_cast %17 : vector<8xf32> to vector<8x1xf32>
    %19 = tpu.reciprocal %18 {approx = true} : vector<8x1xf32> -> vector<8x1xf32>
    %20 = arith.mulf %18, %19 : vector<8x1xf32>
    %cst_11 = arith.constant 2.000000e+00 : f32
    %21 = vector.broadcast %cst_11 : f32 to vector<8x1xf32>
    %22 = arith.subf %21, %20 : vector<8x1xf32>
    %23 = arith.mulf %19, %22 : vector<8x1xf32>
    %24 = vector.broadcast %23 : vector<8x1xf32> to vector<8x8xf32>
    %25 = arith.mulf %16, %24 : vector<8x8xf32>
    %cst_12 = arith.constant dense<0.000000e+00> : vector<8x8xf32>
    %26 = tpu.matmul %25, %8, %cst_12 {dimension_numbers = #tpu.dot_dimension_numbers<[1], [0], [0], [1], [0, 0, 1, 1], [], []>} : vector<8x8xf32>, vector<8x8xf32>, vector<8x8xf32> -> vector<8x8xf32>
    %27 = vector.extract_strided_slice %1 {offsets = [0, 8], sizes = [8, 8], strides = [1, 1]} : vector<8x32xf32> to vector<8x8xf32>
    %28 = vector.extract_strided_slice %3 {offsets = [0, 8], sizes = [8, 8], strides = [1, 1]} : vector<8x32xf32> to vector<8x8xf32>
    %29 = vector.extract_strided_slice %5 {offsets = [0, 8], sizes = [8, 8], strides = [1, 1]} : vector<8x32xf32> to vector<8x8xf32>
    %cst_13 = arith.constant dense<0.000000e+00> : vector<8x8xf32>
    %30 = tpu.matmul %27, %28, %cst_13 {dimension_numbers = #tpu.dot_dimension_numbers<[1], [1], [0], [0], [0, 0, 1, 0], [], []>} : vector<8x8xf32>, vector<8x8xf32>, vector<8x8xf32> -> vector<8x8xf32>
    %cst_14 = arith.constant 0.353553385 : f32
    %31 = vector.broadcast %cst_14 : f32 to vector<8x8xf32>
    %32 = arith.mulf %30, %31 : vector<8x8xf32>
    %cst_15 = arith.constant dense<0xFF800000> : vector<8xf32>
    %33 = vector.multi_reduction <maximumf>, %32, %cst_15 [1] : vector<8x8xf32> to vector<8xf32>
    %34 = vector.shape_cast %33 : vector<8xf32> to vector<8x1xf32>
    %35 = vector.broadcast %34 : vector<8x1xf32> to vector<8x8xf32>
    %36 = arith.subf %32, %35 : vector<8x8xf32>
    %37 = math.exp %36 : vector<8x8xf32>
    %cst_16 = arith.constant dense<0.000000e+00> : vector<8xf32>
    %38 = vector.multi_reduction <add>, %37, %cst_16 [1] : vector<8x8xf32> to vector<8xf32>
    %39 = vector.shape_cast %38 : vector<8xf32> to vector<8x1xf32>
    %40 = tpu.reciprocal %39 {approx = true} : vector<8x1xf32> -> vector<8x1xf32>
    %41 = arith.mulf %39, %40 : vector<8x1xf32>
    %cst_17 = arith.constant 2.000000e+00 : f32
    %42 = vector.broadcast %cst_17 : f32 to vector<8x1xf32>
    %43 = arith.subf %42, %41 : vector<8x1xf32>
    %44 = arith.mulf %40, %43 : vector<8x1xf32>
    %45 = vector.broadcast %44 : vector<8x1xf32> to vector<8x8xf32>
    %46 = arith.mulf %37, %45 : vector<8x8xf32>
    %cst_18 = arith.constant dense<0.000000e+00> : vector<8x8xf32>
    %47 = tpu.matmul %46, %29, %cst_18 {dimension_numbers = #tpu.dot_dimension_numbers<[1], [0], [0], [1], [0, 0, 1, 1], [], []>} : vector<8x8xf32>, vector<8x8xf32>, vector<8x8xf32> -> vector<8x8xf32>
    %48 = vector.extract_strided_slice %1 {offsets = [0, 16], sizes = [8, 8], strides = [1, 1]} : vector<8x32xf32> to vector<8x8xf32>
    %49 = vector.extract_strided_slice %3 {offsets = [0, 16], sizes = [8, 8], strides = [1, 1]} : vector<8x32xf32> to vector<8x8xf32>
    %50 = vector.extract_strided_slice %5 {offsets = [0, 16], sizes = [8, 8], strides = [1, 1]} : vector<8x32xf32> to vector<8x8xf32>
    %cst_19 = arith.constant dense<0.000000e+00> : vector<8x8xf32>
    %51 = tpu.matmul %48, %49, %cst_19 {dimension_numbers = #tpu.dot_dimension_numbers<[1], [1], [0], [0], [0, 0, 1, 0], [], []>} : vector<8x8xf32>, vector<8x8xf32>, vector<8x8xf32> -> vector<8x8xf32>
    %cst_20 = arith.constant 0.353553385 : f32
    %52 = vector.broadcast %cst_20 : f32 to vector<8x8xf32>
    %53 = arith.mulf %51, %52 : vector<8x8xf32>
    %cst_21 = arith.constant dense<0xFF800000> : vector<8xf32>
    %54 = vector.multi_reduction <maximumf>, %53, %cst_21 [1] : vector<8x8xf32> to vector<8xf32>
    %55 = vector.shape_cast %54 : vector<8xf32> to vector<8x1xf32>
    %56 = vector.broadcast %55 : vector<8x1xf32> to vector<8x8xf32>
    %57 = arith.subf %53, %56 : vector<8x8xf32>
    %58 = math.exp %57 : vector<8x8xf32>
    %cst_22 = arith.constant dense<0.000000e+00> : vector<8xf32>
    %59 = vector.multi_reduction <add>, %58, %cst_22 [1] : vector<8x8xf32> to vector<8xf32>
    %60 = vector.shape_cast %59 : vector<8xf32> to vector<8x1xf32>
    %61 = tpu.reciprocal %60 {approx = true} : vector<8x1xf32> -> vector<8x1xf32>
    %62 = arith.mulf %60, %61 : vector<8x1xf32>
    %cst_23 = arith.constant 2.000000e+00 : f32
    %63 = vector.broadcast %cst_23 : f32 to vector<8x1xf32>
    %64 = arith.subf %63, %62 : vector<8x1xf32>
    %65 = arith.mulf %61, %64 : vector<8x1xf32>
    %66 = vector.broadcast %65 : vector<8x1xf32> to vector<8x8xf32>
    %67 = arith.mulf %58, %66 : vector<8x8xf32>
    %cst_24 = arith.constant dense<0.000000e+00> : vector<8x8xf32>
    %68 = tpu.matmul %67, %50, %cst_24 {dimension_numbers = #tpu.dot_dimension_numbers<[1], [0], [0], [1], [0, 0, 1, 1], [], []>} : vector<8x8xf32>, vector<8x8xf32>, vector<8x8xf32> -> vector<8x8xf32>
    %69 = vector.extract_strided_slice %1 {offsets = [0, 24], sizes = [8, 8], strides = [1, 1]} : vector<8x32xf32> to vector<8x8xf32>
    %70 = vector.extract_strided_slice %3 {offsets = [0, 24], sizes = [8, 8], strides = [1, 1]} : vector<8x32xf32> to vector<8x8xf32>
    %71 = vector.extract_strided_slice %5 {offsets = [0, 24], sizes = [8, 8], strides = [1, 1]} : vector<8x32xf32> to vector<8x8xf32>
    %cst_25 = arith.constant dense<0.000000e+00> : vector<8x8xf32>
    %72 = tpu.matmul %69, %70, %cst_25 {dimension_numbers = #tpu.dot_dimension_numbers<[1], [1], [0], [0], [0, 0, 1, 0], [], []>} : vector<8x8xf32>, vector<8x8xf32>, vector<8x8xf32> -> vector<8x8xf32>
    %cst_26 = arith.constant 0.353553385 : f32
    %73 = vector.broadcast %cst_26 : f32 to vector<8x8xf32>
    %74 = arith.mulf %72, %73 : vector<8x8xf32>
    %cst_27 = arith.constant dense<0xFF800000> : vector<8xf32>
    %75 = vector.multi_reduction <maximumf>, %74, %cst_27 [1] : vector<8x8xf32> to vector<8xf32>
    %76 = vector.shape_cast %75 : vector<8xf32> to vector<8x1xf32>
    %77 = vector.broadcast %76 : vector<8x1xf32> to vector<8x8xf32>
    %78 = arith.subf %74, %77 : vector<8x8xf32>
    %79 = math.exp %78 : vector<8x8xf32>
    %cst_28 = arith.constant dense<0.000000e+00> : vector<8xf32>
    %80 = vector.multi_reduction <add>, %79, %cst_28 [1] : vector<8x8xf32> to vector<8xf32>
    %81 = vector.shape_cast %80 : vector<8xf32> to vector<8x1xf32>
    %82 = tpu.reciprocal %81 {approx = true} : vector<8x1xf32> -> vector<8x1xf32>
    %83 = arith.mulf %81, %82 : vector<8x1xf32>
    %cst_29 = arith.constant 2.000000e+00 : f32
    %84 = vector.broadcast %cst_29 : f32 to vector<8x1xf32>
    %85 = arith.subf %84, %83 : vector<8x1xf32>
    %86 = arith.mulf %82, %85 : vector<8x1xf32>
    %87 = vector.broadcast %86 : vector<8x1xf32> to vector<8x8xf32>
    %88 = arith.mulf %79, %87 : vector<8x8xf32>
    %cst_30 = arith.constant dense<0.000000e+00> : vector<8x8xf32>
    %89 = tpu.matmul %88, %71, %cst_30 {dimension_numbers = #tpu.dot_dimension_numbers<[1], [0], [0], [1], [0, 0, 1, 1], [], []>} : vector<8x8xf32>, vector<8x8xf32>, vector<8x8xf32> -> vector<8x8xf32>
    %90 = tpu.concatenate %26, %47, %68, %89 in 1 : vector<8x8xf32>, vector<8x8xf32>, vector<8x8xf32>, vector<8x8xf32> -> vector<8x32xf32>
    %c0_31 = arith.constant 0 : index
    %c0_32 = arith.constant 0 : index
    %c0_33 = arith.constant 0 : index
    %91 = vector.load %arg5[%c0_31, %c0_32, %c0_33] : memref<1x8x32xf32, #tpu.memory_space<vmem>>, vector<1x8x32xf32>
    %92 = vector.shape_cast %91 : vector<1x8x32xf32> to vector<8x32xf32>
    %93 = vector.shape_cast %90 : vector<8x32xf32> to vector<1x8x32xf32>
    tpu.vector_store %arg5[%c0_31, %c0_32, %c0_33], %93 {strides = array<i32>} : memref<1x8x32xf32, #tpu.memory_space<vmem>>, vector<1x8x32xf32>,
    return
  }
  func.func @transform_0(%arg0: i32, %arg1: i32) -> (i32, i32, i32) {
    %c0_i32 = arith.constant 0 : i32
    %c0_i32_0 = arith.constant 0 : i32
    return %arg0, %arg1, %c0_i32 : i32, i32, i32
  }
  func.func @transform_1(%arg0: i32, %arg1: i32) -> (i32, i32, i32) {
    %c0_i32 = arith.constant 0 : i32
    %c0_i32_0 = arith.constant 0 : i32
    %c0_i32_1 = arith.constant 0 : i32
    return %arg0, %c0_i32, %c0_i32_0 : i32, i32, i32
  }
  func.func @transform_2(%arg0: i32, %arg1: i32) -> (i32, i32, i32) {
    %c0_i32 = arith.constant 0 : i32
    %c0_i32_0 = arith.constant 0 : i32
    %c0_i32_1 = arith.constant 0 : i32
    return %arg0, %c0_i32, %c0_i32_0 : i32, i32, i32
  }
  func.func @transform_3(%arg0: i32, %arg1: i32) -> (i32, i32, i32) {
    %c0_i32 = arith.constant 0 : i32
    %c0_i32_0 = arith.constant 0 : i32
    return %arg0, %arg1, %c0_i32 : i32, i32, i32
  }
}

module attributes {stable_mosaic.version = 11 : i64} {
  func.func @_ln_mlp_kernel(%arg0: i32, %arg1: i32, %arg2: memref<16x32xf32, #tpu.memory_space<vmem>>, %arg3: memref<1x32xf32, #tpu.memory_space<vmem>>, %arg4: memref<1x32xf32, #tpu.memory_space<vmem>>, %arg5: memref<32x64xf32, #tpu.memory_space<vmem>>, %arg6: memref<1x64xf32, #tpu.memory_space<vmem>>, %arg7: memref<64x32xf32, #tpu.memory_space<vmem>>, %arg8: memref<1x32xf32, #tpu.memory_space<vmem>>, %arg9: memref<16x32xf32, #tpu.memory_space<vmem>>, %arg10: memref<16x32xf32, #tpu.memory_space<vmem>>, %arg11: memref<16x32xf32, #tpu.memory_space<vmem>>) attributes {dimension_semantics = [#tpu.dimension_semantics<parallel>, #tpu.dimension_semantics<arbitrary>], iteration_bounds = array<i64: 1, 1>, scalar_prefetch = 0 : i64, scratch_operands = 2 : i64, tpu.core_type = #tpu.core_type<tc>, window_params = [{transform_indices = @transform_0, window_bounds = array<i64: 16, 32>}, {pipeline_mode = #tpu.pipeline_mode<synchronous>, transform_indices = @transform_1, window_bounds = array<i64: 1, 32>}, {pipeline_mode = #tpu.pipeline_mode<synchronous>, transform_indices = @transform_2, window_bounds = array<i64: 1, 32>}, {transform_indices = @transform_3, window_bounds = array<i64: 32, 64>}, {transform_indices = @transform_4, window_bounds = array<i64: 1, 64>}, {transform_indices = @transform_5, window_bounds = array<i64: 64, 32>}, {pipeline_mode = #tpu.pipeline_mode<synchronous>, transform_indices = @transform_6, window_bounds = array<i64: 1, 32>}, {transform_indices = @transform_7, window_bounds = array<i64: 16, 32>}]} {
    %c0_i32 = arith.constant 0 : i32
    %0 = arith.cmpi eq, %arg1, %c0_i32 : i32
    %1 = arith.extui %0 : i1 to i32
    %c0_i32_0 = arith.constant 0 : i32
    %2 = arith.cmpi ne, %1, %c0_i32_0 : i32
    scf.if %2 {
      %c0_31 = arith.constant 0 : index
      %c0_32 = arith.constant 0 : index
      %61 = vector.load %arg2[%c0_31, %c0_32] : memref<16x32xf32, #tpu.memory_space<vmem>>, vector<16x32xf32>
      %c0_33 = arith.constant 0 : index
      %c0_34 = arith.constant 0 : index
      %62 = vector.load %arg3[%c0_33, %c0_34] : memref<1x32xf32, #tpu.memory_space<vmem>>, vector<1x32xf32>
      %c0_35 = arith.constant 0 : index
      %c0_36 = arith.constant 0 : index
      %63 = vector.load %arg4[%c0_35, %c0_36] : memref<1x32xf32, #tpu.memory_space<vmem>>, vector<1x32xf32>
      %cst_37 = arith.constant dense<0.000000e+00> : vector<16xf32>
      %64 = vector.multi_reduction <add>, %61, %cst_37 [1] : vector<16x32xf32> to vector<16xf32>
      %65 = vector.shape_cast %64 : vector<16xf32> to vector<16x1xf32>
      %cst_38 = arith.constant 3.200000e+01 : f32
      %66 = vector.broadcast %cst_38 : f32 to vector<16x1xf32>
      %67 = arith.divf %65, %66 : vector<16x1xf32>
      %68 = vector.broadcast %67 : vector<16x1xf32> to vector<16x32xf32>
      %69 = arith.subf %61, %68 : vector<16x32xf32>
      %70 = arith.mulf %69, %69 : vector<16x32xf32>
      %cst_39 = arith.constant dense<0.000000e+00> : vector<16xf32>
      %71 = vector.multi_reduction <add>, %70, %cst_39 [1] : vector<16x32xf32> to vector<16xf32>
      %72 = vector.shape_cast %71 : vector<16xf32> to vector<16x1xf32>
      %cst_40 = arith.constant 3.200000e+01 : f32
      %73 = vector.broadcast %cst_40 : f32 to vector<16x1xf32>
      %74 = arith.divf %72, %73 : vector<16x1xf32>
      %cst_41 = arith.constant 9.99999996E-13 : f32
      %75 = vector.broadcast %cst_41 : f32 to vector<16x1xf32>
      %76 = arith.addf %74, %75 : vector<16x1xf32>
      %77 = math.rsqrt %76 : vector<16x1xf32>
      %78 = vector.broadcast %77 : vector<16x1xf32> to vector<16x32xf32>
      %79 = arith.mulf %69, %78 : vector<16x32xf32>
      %80 = vector.broadcast %62 : vector<1x32xf32> to vector<16x32xf32>
      %81 = arith.mulf %79, %80 : vector<16x32xf32>
      %82 = vector.broadcast %63 : vector<1x32xf32> to vector<16x32xf32>
      %83 = arith.addf %81, %82 : vector<16x32xf32>
      %c0_42 = arith.constant 0 : index
      %c0_43 = arith.constant 0 : index
      %84 = vector.load %arg10[%c0_42, %c0_43] : memref<16x32xf32, #tpu.memory_space<vmem>>, vector<16x32xf32>
      tpu.vector_store %arg10[%c0_42, %c0_43], %83 {strides = array<i32>} : memref<16x32xf32, #tpu.memory_space<vmem>>, vector<16x32xf32>,
      %cst_44 = arith.constant 0.000000e+00 : f32
      %85 = vector.broadcast %cst_44 : f32 to vector<16x32xf32>
      %c0_45 = arith.constant 0 : index
      %c0_46 = arith.constant 0 : index
      %86 = vector.load %arg11[%c0_45, %c0_46] : memref<16x32xf32, #tpu.memory_space<vmem>>, vector<16x32xf32>
      tpu.vector_store %arg11[%c0_45, %c0_46], %85 {strides = array<i32>} : memref<16x32xf32, #tpu.memory_space<vmem>>, vector<16x32xf32>,
    } else {
    }
    %c0 = arith.constant 0 : index
    %c0_1 = arith.constant 0 : index
    %3 = vector.load %arg10[%c0, %c0_1] : memref<16x32xf32, #tpu.memory_space<vmem>>, vector<16x32xf32>
    %c0_2 = arith.constant 0 : index
    %c0_3 = arith.constant 0 : index
    %4 = vector.load %arg5[%c0_2, %c0_3] : memref<32x64xf32, #tpu.memory_space<vmem>>, vector<32x64xf32>
    %cst = arith.constant dense<0.000000e+00> : vector<16x64xf32>
    %5 = tpu.matmul %3, %4, %cst {dimension_numbers = #tpu.dot_dimension_numbers<[1], [0], [0], [1], [0, 0, 1, 1], [], []>} : vector<16x32xf32>, vector<32x64xf32>, vector<16x64xf32> -> vector<16x64xf32>
    %c0_4 = arith.constant 0 : index
    %c0_5 = arith.constant 0 : index
    %6 = vector.load %arg6[%c0_4, %c0_5] : memref<1x64xf32, #tpu.memory_space<vmem>>, vector<1x64xf32>
    %7 = vector.broadcast %6 : vector<1x64xf32> to vector<16x64xf32>
    %8 = arith.addf %5, %7 : vector<16x64xf32>
    %cst_6 = arith.constant 0.707106769 : f32
    %9 = vector.broadcast %cst_6 : f32 to vector<16x64xf32>
    %10 = arith.mulf %8, %9 : vector<16x64xf32>
    %cst_7 = arith.constant 0.000000e+00 : f32
    %11 = vector.broadcast %cst_7 : f32 to vector<16x64xf32>
    %12 = arith.cmpf olt, %10, %11 : vector<16x64xf32>
    %cst_8 = arith.constant -1.000000e+00 : f32
    %cst_9 = arith.constant 1.000000e+00 : f32
    %13 = vector.broadcast %cst_8 : f32 to vector<16x64xf32>
    %14 = vector.broadcast %cst_9 : f32 to vector<16x64xf32>
    %15 = arith.select %12, %13, %14 : vector<16x64xi1>, vector<16x64xf32>
    %16 = math.absf %10 : vector<16x64xf32>
    %cst_10 = arith.constant 0.327591091 : f32
    %17 = vector.broadcast %cst_10 : f32 to vector<16x64xf32>
    %18 = arith.mulf %17, %16 : vector<16x64xf32>
    %cst_11 = arith.constant 1.000000e+00 : f32
    %19 = vector.broadcast %cst_11 : f32 to vector<16x64xf32>
    %20 = arith.addf %19, %18 : vector<16x64xf32>
    %21 = tpu.reciprocal %20 {approx = true} : vector<16x64xf32> -> vector<16x64xf32>
    %22 = arith.mulf %20, %21 : vector<16x64xf32>
    %cst_12 = arith.constant 2.000000e+00 : f32
    %23 = vector.broadcast %cst_12 : f32 to vector<16x64xf32>
    %24 = arith.subf %23, %22 : vector<16x64xf32>
    %25 = arith.mulf %21, %24 : vector<16x64xf32>
    %cst_13 = arith.constant 1.06140542 : f32
    %26 = vector.broadcast %cst_13 : f32 to vector<16x64xf32>
    %27 = arith.mulf %26, %25 : vector<16x64xf32>
    %cst_14 = arith.constant -1.45315206 : f32
    %28 = vector.broadcast %cst_14 : f32 to vector<16x64xf32>
    %29 = arith.addf %27, %28 : vector<16x64xf32>
    %30 = arith.mulf %29, %25 : vector<16x64xf32>
    %cst_15 = arith.constant 1.42141378 : f32
    %31 = vector.broadcast %cst_15 : f32 to vector<16x64xf32>
    %32 = arith.addf %30, %31 : vector<16x64xf32>
    %33 = arith.mulf %32, %25 : vector<16x64xf32>
    %cst_16 = arith.constant -0.284496725 : f32
    %34 = vector.broadcast %cst_16 : f32 to vector<16x64xf32>
    %35 = arith.addf %33, %34 : vector<16x64xf32>
    %36 = arith.mulf %35, %25 : vector<16x64xf32>
    %cst_17 = arith.constant 0.254829586 : f32
    %37 = vector.broadcast %cst_17 : f32 to vector<16x64xf32>
    %38 = arith.addf %36, %37 : vector<16x64xf32>
    %39 = arith.mulf %38, %25 : vector<16x64xf32>
    %cst_18 = arith.constant 0.000000e+00 : f32
    %40 = vector.broadcast %cst_18 : f32 to vector<16x64xf32>
    %41 = arith.subf %40, %16 : vector<16x64xf32>
    %42 = arith.mulf %41, %16 : vector<16x64xf32>
    %43 = math.exp %42 : vector<16x64xf32>
    %44 = arith.mulf %39, %43 : vector<16x64xf32>
    %cst_19 = arith.constant 1.000000e+00 : f32
    %45 = vector.broadcast %cst_19 : f32 to vector<16x64xf32>
    %46 = arith.subf %45, %44 : vector<16x64xf32>
    %47 = arith.mulf %15, %46 : vector<16x64xf32>
    %cst_20 = arith.constant 5.000000e-01 : f32
    %48 = vector.broadcast %cst_20 : f32 to vector<16x64xf32>
    %49 = arith.mulf %48, %8 : vector<16x64xf32>
    %cst_21 = arith.constant 1.000000e+00 : f32
    %50 = vector.broadcast %cst_21 : f32 to vector<16x64xf32>
    %51 = arith.addf %50, %47 : vector<16x64xf32>
    %52 = arith.mulf %49, %51 : vector<16x64xf32>
    %c0_22 = arith.constant 0 : index
    %c0_23 = arith.constant 0 : index
    %53 = vector.load %arg11[%c0_22, %c0_23] : memref<16x32xf32, #tpu.memory_space<vmem>>, vector<16x32xf32>
    %c0_24 = arith.constant 0 : index
    %c0_25 = arith.constant 0 : index
    %54 = vector.load %arg7[%c0_24, %c0_25] : memref<64x32xf32, #tpu.memory_space<vmem>>, vector<64x32xf32>
    %cst_26 = arith.constant dense<0.000000e+00> : vector<16x32xf32>
    %55 = tpu.matmul %52, %54, %cst_26 {dimension_numbers = #tpu.dot_dimension_numbers<[1], [0], [0], [1], [0, 0, 1, 1], [], []>} : vector<16x64xf32>, vector<64x32xf32>, vector<16x32xf32> -> vector<16x32xf32>
    %56 = arith.addf %53, %55 : vector<16x32xf32>
    %c0_27 = arith.constant 0 : index
    %c0_28 = arith.constant 0 : index
    %57 = vector.load %arg11[%c0_27, %c0_28] : memref<16x32xf32, #tpu.memory_space<vmem>>, vector<16x32xf32>
    tpu.vector_store %arg11[%c0_27, %c0_28], %56 {strides = array<i32>} : memref<16x32xf32, #tpu.memory_space<vmem>>, vector<16x32xf32>,
    %c0_i32_29 = arith.constant 0 : i32
    %58 = arith.cmpi eq, %arg1, %c0_i32_29 : i32
    %59 = arith.extui %58 : i1 to i32
    %c0_i32_30 = arith.constant 0 : i32
    %60 = arith.cmpi ne, %59, %c0_i32_30 : i32
    scf.if %60 {
      %c0_31 = arith.constant 0 : index
      %c0_32 = arith.constant 0 : index
      %61 = vector.load %arg11[%c0_31, %c0_32] : memref<16x32xf32, #tpu.memory_space<vmem>>, vector<16x32xf32>
      %c0_33 = arith.constant 0 : index
      %c0_34 = arith.constant 0 : index
      %62 = vector.load %arg8[%c0_33, %c0_34] : memref<1x32xf32, #tpu.memory_space<vmem>>, vector<1x32xf32>
      %63 = vector.broadcast %62 : vector<1x32xf32> to vector<16x32xf32>
      %64 = arith.addf %61, %63 : vector<16x32xf32>
      %c0_35 = arith.constant 0 : index
      %c0_36 = arith.constant 0 : index
      %65 = vector.load %arg2[%c0_35, %c0_36] : memref<16x32xf32, #tpu.memory_space<vmem>>, vector<16x32xf32>
      %66 = arith.addf %64, %65 : vector<16x32xf32>
      %c0_37 = arith.constant 0 : index
      %c0_38 = arith.constant 0 : index
      %67 = vector.load %arg9[%c0_37, %c0_38] : memref<16x32xf32, #tpu.memory_space<vmem>>, vector<16x32xf32>
      tpu.vector_store %arg9[%c0_37, %c0_38], %66 {strides = array<i32>} : memref<16x32xf32, #tpu.memory_space<vmem>>, vector<16x32xf32>,
    } else {
    }
    return
  }
  func.func @transform_0(%arg0: i32, %arg1: i32) -> (i32, i32) {
    %c0_i32 = arith.constant 0 : i32
    %c0_i32_0 = arith.constant 0 : i32
    return %arg0, %c0_i32 : i32, i32
  }
  func.func @transform_1(%arg0: i32, %arg1: i32) -> (i32, i32) {
    %c0_i32 = arith.constant 0 : i32
    %c0_i32_0 = arith.constant 0 : i32
    %c0_i32_1 = arith.constant 0 : i32
    return %c0_i32, %c0_i32_0 : i32, i32
  }
  func.func @transform_2(%arg0: i32, %arg1: i32) -> (i32, i32) {
    %c0_i32 = arith.constant 0 : i32
    %c0_i32_0 = arith.constant 0 : i32
    %c0_i32_1 = arith.constant 0 : i32
    return %c0_i32, %c0_i32_0 : i32, i32
  }
  func.func @transform_3(%arg0: i32, %arg1: i32) -> (i32, i32) {
    %c0_i32 = arith.constant 0 : i32
    %c0_i32_0 = arith.constant 0 : i32
    return %c0_i32, %arg1 : i32, i32
  }
  func.func @transform_4(%arg0: i32, %arg1: i32) -> (i32, i32) {
    %c0_i32 = arith.constant 0 : i32
    %c0_i32_0 = arith.constant 0 : i32
    return %c0_i32, %arg1 : i32, i32
  }
  func.func @transform_5(%arg0: i32, %arg1: i32) -> (i32, i32) {
    %c0_i32 = arith.constant 0 : i32
    %c0_i32_0 = arith.constant 0 : i32
    return %arg1, %c0_i32 : i32, i32
  }
  func.func @transform_6(%arg0: i32, %arg1: i32) -> (i32, i32) {
    %c0_i32 = arith.constant 0 : i32
    %c0_i32_0 = arith.constant 0 : i32
    %c0_i32_1 = arith.constant 0 : i32
    return %c0_i32, %c0_i32_0 : i32, i32
  }
  func.func @transform_7(%arg0: i32, %arg1: i32) -> (i32, i32) {
    %c0_i32 = arith.constant 0 : i32
    %c0_i32_0 = arith.constant 0 : i32
    return %arg0, %c0_i32 : i32, i32
  }
}

</mosaic_0001>

<llo_original>
// kernel: ssast_layer.6
$region0: #{ssast_layer.6}
  #allocation0 [shape = 'u32[]', space=smem, size = 0x4, offset = 0x4, fixed_abs, tag = 'smem constant byte address 0x4 - core index']
  #allocation1 [shape = 'u32[144,128]{1,0:T(1,128)}', space=vmem, size = 0x12000, scoped, tag = 'internal scratch']
  %s0 = inlined_call_operand.vmem [shape: f32[16,32], index: 0, kind: input, shape index: {}, may-alias: {0,4}]
  %s1 = inlined_call_operand.vmem [shape: f32[32,32], index: 1, kind: input, shape index: {}]
  %s2 = inlined_call_operand.vmem [shape: f32[1,32], index: 2, kind: input, shape index: {}]
  %s3 = inlined_call_operand.vmem [shape: f32[16,32], index: 3, kind: input, shape index: {}]
  %s4 = inlined_call_operand.vmem [shape: f32[16,32], index: 4, kind: output, shape index: {}, may-alias: {0,4}]
  %s5 = sld [smem:[#allocation0]]
  $region26: #{ssast_layer.6} parent=0
    _
  %s7 = ssub.s32 1, %s5
  %s8 = scalar_select 0, %s7, %s5
  // Predicated region
  $region2: #{ssast_layer.6} parent=0 // pred_check
    _
  $region3: #{ssast_layer.6} parent=0 // pred_check_branch
    %10 = sbr.rel (0) target = $region5
  $region4: #{ssast_layer.6} parent=0 // pred_region
    _
  $region5: #{ssast_layer.6} parent=0 // pred_fallthru
    _
  // Predicated region
  $region6: #{ssast_layer.6} parent=0 // pred_check
    _
  $region7: #{ssast_layer.6} parent=0 // pred_check_branch
    %12 = sbr.rel (0) target = $region9
  $region8: #{ssast_layer.6} parent=0 // pred_region
    _
  $region9: #{ssast_layer.6} parent=0 // pred_fallthru
    _
  // Predicated region
  $region10: #{ssast_layer.6} parent=0 // pred_check
    _
  $region11: #{ssast_layer.6} parent=0 // pred_check_branch
    %14 = sbr.rel (0) target = $region13
  $region12: #{ssast_layer.6} parent=0 // pred_region
    _
  $region13: #{ssast_layer.6} parent=0 // pred_fallthru
    _
  // Predicated region
  $region14: #{ssast_layer.6} parent=0 // pred_check
    _
  $region15: #{ssast_layer.6} parent=0 // pred_check_branch
    %16 = sbr.rel (0) target = $region17
  $region16: #{ssast_layer.6} parent=0 // pred_region
    _
  $region17: #{ssast_layer.6} parent=0 // pred_fallthru
    _
  %v17 = vld [vmem:[%s0] sm:$0xff]
  %v18 = vld [vmem:[%s0 + $0x8] sm:$0xff]
  %v19 = vld [vmem:[%s1] sm:$0xff]
  %v20 = vld [vmem:[%s1 + $0x8] sm:$0xff]
  %v21 = vld [vmem:[%s1 + $0x10] sm:$0xff]
  %v22 = vld [vmem:[%s1 + $0x18] sm:$0xff]
  %v23 = vld [vmem:[%s2] sm:$0x1]
  %v25 = vlaneseq
  %v26 = vshrl.u32 %v25, 7
  %v27 = vsub.s32 0, %v26
  %v28 = vrot.slane %v23, %v27
  %vm30 = vcmask 261120
  %v32 = vsel %vm30, %v17, 0
  %v35 = vsel %vm30, %v18, 0
  %37 = vmatprep.subr.mxu0 0.0
  %38 = vmatpush1.msra.mxu0 %v19
  %39 = vmatprep.subr.mxu0 0.0
  %40 = vmatpush1.msra.mxu0 %v20
  %41 = vmatprep.subr.mxu0 0.0
  %42 = vmatpush1.msra.mxu0 %v21
  %43 = vmatprep.subr.mxu0 0.0
  %44 = vmatpush1.msra.mxu0 %v22
  %45 = vmatprep.subr.mxu0 0.0
  %46 = vmatpush1.msra.mxu0 0.0
  %47 = vmatprep.subr.mxu0 0.0
  %48 = vmatpush1.msra.mxu0 0.0
  %49 = vmatprep.subr.mxu0 0.0
  %50 = vmatpush1.msra.mxu0 0.0
  %51 = vmatprep.subr.mxu0 0.0
  %52 = vmatpush1.msra.mxu0 0.0
  %53 = vmatprep.subr.mxu0 0.0
  %54 = vmatpush1.msra.mxu0 0.0
  %55 = vmatprep.subr.mxu0 0.0
  %56 = vmatpush1.msra.mxu0 0.0
  %57 = vmatprep.subr.mxu0 0.0
  %58 = vmatpush1.msra.mxu0 0.0
  %59 = vmatprep.subr.mxu0 0.0
  %60 = vmatpush1.msra.mxu0 0.0
  %61 = vmatprep.subr.mxu0 0.0
  %62 = vmatpush1.msra.mxu0 0.0
  %63 = vmatprep.subr.mxu0 0.0
  %64 = vmatpush1.msra.mxu0 0.0
  %65 = vmatprep.subr.mxu0 0.0
  %66 = vmatpush1.msra.mxu0 0.0
  %67 = vmatprep.subr.mxu0 0.0
  %68 = vmatpush1.msra.mxu0 0.0
  %69 = vmatprep.subr.mxu0 0.0
  %70 = vmatpush1.msra.mxu0 0.0
  %71 = vmatprep.subr.mxu0 0.0
  %72 = vmatpush1.msra.mxu0 0.0
  %73 = vmatprep.subr.mxu0 0.0
  %74 = vmatpush1.msra.mxu0 0.0
  %75 = vmatprep.subr.mxu0 0.0
  %76 = vmatpush1.msra.mxu0 0.0
  %77 = vmatprep.subr.mxu0 0.0
  %78 = vmatpush1.msra.mxu0 0.0
  %79 = vmatprep.subr.mxu0 0.0
  %80 = vmatpush1.msra.mxu0 0.0
  %81 = vmatprep.subr.mxu0 0.0
  %82 = vmatpush1.msra.mxu0 0.0
  %83 = vmatprep.subr.mxu0 0.0
  %84 = vmatpush1.msra.mxu0 0.0
  %85 = vmatprep.subr.mxu0 0.0
  %86 = vmatpush1.msra.mxu0 0.0
  %87 = vmatprep.subr.mxu0 0.0
  %88 = vmatpush1.msra.mxu0 0.0
  %89 = vmatprep.subr.mxu0 0.0
  %90 = vmatpush1.msra.mxu0 0.0
  %91 = vmatprep.subr.mxu0 0.0
  %92 = vmatpush1.msra.mxu0 0.0
  %93 = vmatprep.subr.mxu0 0.0
  %94 = vmatpush1.msra.mxu0 0.0
  %95 = vmatprep.subr.mxu0 0.0
  %96 = vmatpush1.msra.mxu0 0.0
  %97 = vmatprep.subr.mxu0 0.0
  %98 = vmatpush1.msra.mxu0 0.0
  %99 = vmatprep.subr.mxu0 0.0
  %100 = vmatpush1.msra.mxu0 0.0
  %101 = vmatprep.mubr.f32.mxu0 0.0
  %102 = vmatmul.mubr.f32.gmra.mrb[0].mxu0 %v32
  %v103 = vpop.f32.mrb[0].mxu0
  %v104 = vadd.f32 %v28, %v103
  %v105 = vpop.f32.mrb[0].mxu0
  %106 = vmatprep.mubr.f32.mxu0 0.0
  %107 = vmatmul.mubr.f32.gmra.mrb[0].mxu0 %v35
  %v108 = vpop.f32.mrb[0].mxu0
  %v109 = vadd.f32 %v28, %v108
  %v110 = vpop.f32.mrb[0].mxu0
  %111 = vdwg.mxu0
  %v112 = vld [vmem:[%s3] sm:$0xff]
  %v113 = vld [vmem:[%s3 + $0x8] sm:$0xff]
  %v114 = vadd.f32 %v104, %v112
  %v115 = vadd.f32 %v109, %v113
  %116 = vst.msk [vmem:[%s4] sm:$0xff] %vm30, %v114
  %117 = vst.msk [vmem:[%s4 + $0x8] sm:$0xff] %vm30, %v115
  // Predicated region
  $region18: #{ssast_layer.6} parent=0 // pred_check
    _
  $region19: #{ssast_layer.6} parent=0 // pred_check_branch
    %119 = sbr.rel (0) target = $region21
  $region20: #{ssast_layer.6} parent=0 // pred_region
    _
  $region21: #{ssast_layer.6} parent=0 // pred_fallthru
    _
  // Predicated region
  $region22: #{ssast_layer.6} parent=0 // pred_check
    _
  $region23: #{ssast_layer.6} parent=0 // pred_check_branch
    %121 = sbr.rel (0) target = $region25
  $region24: #{ssast_layer.6} parent=0 // pred_region
    _
  $region25: #{ssast_layer.6} parent=0 // pred_fallthru
    _

// kernel: ssast_layer.4
$region0: #{ssast_layer.4}
  #allocation0 [shape = 'u32[]', space=smem, size = 0x4, offset = 0x4, fixed_abs, tag = 'smem constant byte address 0x4 - core index']
  #allocation1 [shape = 'u32[144,128]{1,0:T(1,128)}', space=vmem, size = 0x12000, scoped, tag = 'internal scratch']
  %s0 = inlined_call_operand.hbm [shape: f32[16,32], index: 0, kind: input, shape index: {}]
  %s1 = inlined_call_operand.vmem [shape: f32[1,32], index: 1, kind: input, shape index: {}]
  %s2 = inlined_call_operand.vmem [shape: f32[1,32], index: 2, kind: input, shape index: {}]
  %s3 = inlined_call_operand.vmem [shape: f32[32,96], index: 3, kind: input, shape index: {}]
  %s4 = inlined_call_operand.vmem [shape: f32[1,96], index: 4, kind: input, shape index: {}]
  %s5 = inlined_call_operand.vmem [shape: f32[16,32], index: 5, kind: output, shape index: {0}]
  %s6 = inlined_call_operand.vmem [shape: f32[16,32], index: 6, kind: output, shape index: {1}]
  %s7 = inlined_call_operand.vmem [shape: f32[16,32], index: 7, kind: output, shape index: {2}]
  %8 = xla_tuple %s5, %s6, %s7
  %s9 = sld [smem:[#allocation0]]
  $region50: #{ssast_layer.4} parent=0
    _
  %s11 = ssub.s32 1, %s9
  %s12 = scalar_select 0, %s11, %s9
  $region1: #{ssast_layer.4} parent=0
    #allocation2 [shape = 'u8[8192]{0}', space=vmem, size = 0x2000, scoped, tag = 'input window, operand 0, single buffered']
    #allocation3 [shape = 's32[1]{0}', space=sflag, size = 0x4, scoped, tag = 'scoped memory for ssast_layer.4']
    %13 = vsyncpa [#allocation3], 0
    // Predicated region
    $region2: #{ssast_layer.4} parent=1 // pred_check
      _
    $region3: #{ssast_layer.4} parent=1 // pred_check_branch
      %15 = sbr.rel (0) target = $region5
    $region4: #{ssast_layer.4} parent=1 // pred_region
      %s17 = ssub.s32 256, 256
      %18 = vsyncadd [#allocation3], %s17
      %s19 = sshll.u32 [#allocation2], 4
      %s20 = int_to_ptr.vmem [resolvable:$true] %s19
      %25 = dma.hbm_to_vmem [thread:$0]  %s0, 256, %s20, [#allocation3], 128, 128, 8
    $region5: #{ssast_layer.4} parent=1 // pred_fallthru
      _
    // Predicated region
    $region6: #{ssast_layer.4} parent=1 // pred_check
      _
    $region7: #{ssast_layer.4} parent=1 // pred_check_branch
      %27 = sbr.rel (0) target = $region9
    $region8: #{ssast_layer.4} parent=1 // pred_region
      _
    $region9: #{ssast_layer.4} parent=1 // pred_fallthru
      _
    // Predicated region
    $region10: #{ssast_layer.4} parent=1 // pred_check
      _
    $region11: #{ssast_layer.4} parent=1 // pred_check_branch
      %29 = sbr.rel (0) target = $region13
    $region12: #{ssast_layer.4} parent=1 // pred_region
      _
    $region13: #{ssast_layer.4} parent=1 // pred_fallthru
      _
    // Predicated region
    $region14: #{ssast_layer.4} parent=1 // pred_check
      _
    $region15: #{ssast_layer.4} parent=1 // pred_check_branch
      %31 = sbr.rel (0) target = $region17
    $region16: #{ssast_layer.4} parent=1 // pred_region
      _
    $region17: #{ssast_layer.4} parent=1 // pred_fallthru
      _
    // Predicated region
    $region18: #{ssast_layer.4} parent=1 // pred_check
      _
    $region19: #{ssast_layer.4} parent=1 // pred_check_branch
      %33 = sbr.rel (0) target = $region21
    $region20: #{ssast_layer.4} parent=1 // pred_region
      _
    $region21: #{ssast_layer.4} parent=1 // pred_fallthru
      _
    // Predicated region
    $region22: #{ssast_layer.4} parent=1 // pred_check
      _
    $region23: #{ssast_layer.4} parent=1 // pred_check_branch
      %35 = sbr.rel (0) target = $region25
    $region24: #{ssast_layer.4} parent=1 // pred_region
      %36 = dma.done [#allocation3], 256
    $region25: #{ssast_layer.4} parent=1 // pred_fallthru
      _
    %v37 = vld [vmem:[#allocation2] sm:$0xff]
    %v38 = vld [vmem:[#allocation2 + $0x8] sm:$0xff]
    %v39 = vld [vmem:[%s1] sm:$0x1]
    %v40 = vld [vmem:[%s2] sm:$0x1]
    %vm41 = vcmask 261120
    %v42 = vsel %vm41, %v37, 0.0
    %43 = vadd.xlane.f32.xlu0 %v42
    %v44 = vpop.xlane.xlu0 %43
    %v45 = vsel %vm41, %v38, 0.0
    %46 = vadd.xlane.f32.xlu0 %v45
    %v47 = vpop.xlane.xlu0 %46
    %v48 = vrcp.pop 32.0
    %v49 = vmul.f32 %v44, %v48
    %v50 = vmul.f32 %v47, %v48
    %v51 = vsub.f32 %v37, %v49
    %v52 = vsub.f32 %v38, %v50
    %v53 = vmul.f32 %v51, %v51
    %v54 = vmul.f32 %v52, %v52
    %v55 = vsel %vm41, %v53, 0.0
    %56 = vadd.xlane.f32.xlu0 %v55
    %v57 = vpop.xlane.xlu0 %56
    %v58 = vsel %vm41, %v54, 0.0
    %59 = vadd.xlane.f32.xlu0 %v58
    %v60 = vpop.xlane.xlu0 %59
    %v61 = vmul.f32 %v57, %v48
    %v62 = vmul.f32 %v60, %v48
    %v63 = vadd.f32 %v61, 1e-12
    %v64 = vadd.f32 %v62, 1e-12
    %v65 = vrsqrt.pop %v63
    %v66 = vrsqrt.pop %v64
    %v67 = vmul.f32 %v51, %v65
    %v68 = vmul.f32 %v52, %v66
    %v70 = vlaneseq
    %v71 = vshrl.u32 %v70, 7
    %v72 = vsub.s32 0, %v71
    %v73 = vrot.slane %v39, %v72
    %v75 = vmul.f32 %v67, %v73
    %v76 = vmul.f32 %v68, %v73
    %v78 = vlaneseq
    %v79 = vshrl.u32 %v78, 7
    %v80 = vsub.s32 0, %v79
    %v81 = vrot.slane %v40, %v80
    %v83 = vadd.f32 %v75, %v81
    %v84 = vadd.f32 %v76, %v81
    %v85 = vld [vmem:[%s3] sm:$0xff]
    %v86 = vld [vmem:[%s3 + $0x8] sm:$0xff]
    %v87 = vld [vmem:[%s3 + $0x10] sm:$0xff]
    %v88 = vld [vmem:[%s3 + $0x18] sm:$0xff]
    %v89 = vld [vmem:[%s4] sm:$0x1]
    %v91 = vlaneseq
    %v92 = vshrl.u32 %v91, 7
    %v93 = vsub.s32 0, %v92
    %v94 = vrot.slane %v89, %v93
    %v97 = vsel %vm41, %v83, 0
    %v100 = vsel %vm41, %v84, 0
    %102 = vmatprep.subr.mxu0 0.0
    %103 = vmatpush1.msra.mxu0 %v85
    %104 = vmatprep.subr.mxu0 0.0
    %105 = vmatpush1.msra.mxu0 %v86
    %106 = vmatprep.subr.mxu0 0.0
    %107 = vmatpush1.msra.mxu0 %v87
    %108 = vmatprep.subr.mxu0 0.0
    %109 = vmatpush1.msra.mxu0 %v88
    %110 = vmatprep.subr.mxu0 0.0
    %111 = vmatpush1.msra.mxu0 0.0
    %112 = vmatprep.subr.mxu0 0.0
    %113 = vmatpush1.msra.mxu0 0.0
    %114 = vmatprep.subr.mxu0 0.0
    %115 = vmatpush1.msra.mxu0 0.0
    %116 = vmatprep.subr.mxu0 0.0
    %117 = vmatpush1.msra.mxu0 0.0
    %118 = vmatprep.subr.mxu0 0.0
    %119 = vmatpush1.msra.mxu0 0.0
    %120 = vmatprep.subr.mxu0 0.0
    %121 = vmatpush1.msra.mxu0 0.0
    %122 = vmatprep.subr.mxu0 0.0
    %123 = vmatpush1.msra.mxu0 0.0
    %124 = vmatprep.subr.mxu0 0.0
    %125 = vmatpush1.msra.mxu0 0.0
    %126 = vmatprep.subr.mxu0 0.0
    %127 = vmatpush1.msra.mxu0 0.0
    %128 = vmatprep.subr.mxu0 0.0
    %129 = vmatpush1.msra.mxu0 0.0
    %130 = vmatprep.subr.mxu0 0.0
    %131 = vmatpush1.msra.mxu0 0.0
    %132 = vmatprep.subr.mxu0 0.0
    %133 = vmatpush1.msra.mxu0 0.0
    %134 = vmatprep.subr.mxu0 0.0
    %135 = vmatpush1.msra.mxu0 0.0
    %136 = vmatprep.subr.mxu0 0.0
    %137 = vmatpush1.msra.mxu0 0.0
    %138 = vmatprep.subr.mxu0 0.0
    %139 = vmatpush1.msra.mxu0 0.0
    %140 = vmatprep.subr.mxu0 0.0
    %141 = vmatpush1.msra.mxu0 0.0
    %142 = vmatprep.subr.mxu0 0.0
    %143 = vmatpush1.msra.mxu0 0.0
    %144 = vmatprep.subr.mxu0 0.0
    %145 = vmatpush1.msra.mxu0 0.0
    %146 = vmatprep.subr.mxu0 0.0
    %147 = vmatpush1.msra.mxu0 0.0
    %148 = vmatprep.subr.mxu0 0.0
    %149 = vmatpush1.msra.mxu0 0.0
    %150 = vmatprep.subr.mxu0 0.0
    %151 = vmatpush1.msra.mxu0 0.0
    %152 = vmatprep.subr.mxu0 0.0
    %153 = vmatpush1.msra.mxu0 0.0
    %154 = vmatprep.subr.mxu0 0.0
    %155 = vmatpush1.msra.mxu0 0.0
    %156 = vmatprep.subr.mxu0 0.0
    %157 = vmatpush1.msra.mxu0 0.0
    %158 = vmatprep.subr.mxu0 0.0
    %159 = vmatpush1.msra.mxu0 0.0
    %160 = vmatprep.subr.mxu0 0.0
    %161 = vmatpush1.msra.mxu0 0.0
    %162 = vmatprep.subr.mxu0 0.0
    %163 = vmatpush1.msra.mxu0 0.0
    %164 = vmatprep.subr.mxu0 0.0
    %165 = vmatpush1.msra.mxu0 0.0
    %166 = vmatprep.mubr.f32.mxu0 0.0
    %167 = vmatmul.mubr.f32.gmra.mrb[0].mxu0 %v97
    %v168 = vpop.f32.mrb[0].mxu0
    %v169 = vadd.f32 %v94, %v168
    %v170 = vpop.f32.mrb[0].mxu0
    %171 = vmatprep.mubr.f32.mxu0 0.0
    %172 = vmatmul.mubr.f32.gmra.mrb[0].mxu0 %v100
    %v173 = vpop.f32.mrb[0].mxu0
    %v174 = vadd.f32 %v94, %v173
    %v175 = vpop.f32.mrb[0].mxu0
    %176 = vdwg.mxu0
    %177 = vst.msk [vmem:[%s5] sm:$0xff] %vm41, %v169
    %178 = vst.msk [vmem:[%s5 + $0x8] sm:$0xff] %vm41, %v174
    %181 = vrot.lane.b32.xlu0 %v169, 96
    %v182 = vpop.permute.xlu0 %181
    %183 = vrot.lane.b32.xlu0 %v174, 96
    %v184 = vpop.permute.xlu0 %183
    %187 = vst.msk [vmem:[%s6] sm:$0xff] %vm41, %v182
    %188 = vst.msk [vmem:[%s6 + $0x8] sm:$0xff] %vm41, %v184
    %189 = vrot.lane.b32.xlu0 %v169, 64
    %v190 = vpop.permute.xlu0 %189
    %191 = vrot.lane.b32.xlu0 %v174, 64
    %v192 = vpop.permute.xlu0 %191
    %195 = vst.msk [vmem:[%s7] sm:$0xff] %vm41, %v190
    %196 = vst.msk [vmem:[%s7 + $0x8] sm:$0xff] %vm41, %v192
    // Predicated region
    $region26: #{ssast_layer.4} parent=1 // pred_check
      _
    $region27: #{ssast_layer.4} parent=1 // pred_check_branch
      %198 = sbr.rel (0) target = $region29
    $region28: #{ssast_layer.4} parent=1 // pred_region
      _
    $region29: #{ssast_layer.4} parent=1 // pred_fallthru
      _
    // Predicated region
    $region30: #{ssast_layer.4} parent=1 // pred_check
      _
    $region31: #{ssast_layer.4} parent=1 // pred_check_branch
      %200 = sbr.rel (0) target = $region33
    $region32: #{ssast_layer.4} parent=1 // pred_region
      _
    $region33: #{ssast_layer.4} parent=1 // pred_fallthru
      _
    // Predicated region
    $region34: #{ssast_layer.4} parent=1 // pred_check
      _
    $region35: #{ssast_layer.4} parent=1 // pred_check_branch
      %202 = sbr.rel (0) target = $region37
    $region36: #{ssast_layer.4} parent=1 // pred_region
      _
    $region37: #{ssast_layer.4} parent=1 // pred_fallthru
      _
    // Predicated region
    $region38: #{ssast_layer.4} parent=1 // pred_check
      _
    $region39: #{ssast_layer.4} parent=1 // pred_check_branch
      %204 = sbr.rel (0) target = $region41
    $region40: #{ssast_layer.4} parent=1 // pred_region
      _
    $region41: #{ssast_layer.4} parent=1 // pred_fallthru
      _
    // Predicated region
    $region42: #{ssast_layer.4} parent=1 // pred_check
      _
    $region43: #{ssast_layer.4} parent=1 // pred_check_branch
      %206 = sbr.rel (0) target = $region45
    $region44: #{ssast_layer.4} parent=1 // pred_region
      _
    $region45: #{ssast_layer.4} parent=1 // pred_fallthru
      _
    // Predicated region
    $region46: #{ssast_layer.4} parent=1 // pred_check
      _
    $region47: #{ssast_layer.4} parent=1 // pred_check_branch
      %208 = sbr.rel (0) target = $region49
    $region48: #{ssast_layer.4} parent=1 // pred_region
      _
    $region49: #{ssast_layer.4} parent=1 // pred_fallthru
      _
    %209 = vsyncpa [#allocation3], 1

// kernel: ssast_layer.5
$region0: #{ssast_layer.5}
  #allocation0 [shape = 'u32[]', space=smem, size = 0x4, offset = 0x4, fixed_abs, tag = 'smem constant byte address 0x4 - core index']
  #allocation1 [shape = 'u32[144,128]{1,0:T(1,128)}', space=vmem, size = 0x12000, scoped, tag = 'internal scratch']
  %s0 = inlined_call_operand.vmem [shape: f32[2,8,32], index: 0, kind: input, shape index: {}]
  %s1 = inlined_call_operand.vmem [shape: f32[2,8,32], index: 1, kind: input, shape index: {}]
  %s2 = inlined_call_operand.vmem [shape: f32[2,8,32], index: 2, kind: input, shape index: {}]
  %s3 = inlined_call_operand.vmem [shape: f32[2,8,32], index: 3, kind: output, shape index: {}]
  %s4 = sld [smem:[#allocation0]]
  $region45: #{ssast_layer.5} parent=0
    _
  %s6 = ssub.s32 1, %s4
  %s7 = scalar_select 0, %s6, %s4
  loop: start=0, step=1, limit=4
  $region2: #{ssast_layer.5} parent=0 // loop_pre_header
    _
  $region3: #{ssast_layer.5} parent=0 // loop_header
    %s9 = sphi 0, %s13
    %p10 = scmp.ge.s32.totalorder %s9, 4
    %s16 = sphi 0, %s28
    %s17 = sphi 0, %s24
    %s18 = sphi 0, %s16
    %s19 = sphi 0, %s17
    %s20 = sphi 0, %s18
    %s21 = sphi 0, %s19
    %s33 = sphi 0, %s35
    %s36 = sphi 0, %s33
    %s37 = sphi 0, %s36
    %s53 = sphi 0, %s37
    %s59 = sphi 0, %s61
    %s62 = sphi 0, %s59
    %s63 = sphi 0, %s62
    %s79 = sphi 0, %s63
    %s85 = sphi 0, %s87
    %s88 = sphi 0, %s85
    %s89 = sphi 0, %s88
    %s105 = sphi 0, %s89
    %s113 = sphi 0, %s115
    %s116 = sphi 0, %s113
    %s117 = sphi 0, %s116
    %s133 = sphi 0, %s117
  $region4: #{ssast_layer.5} parent=0 // loop_header_branch
    %12 = sbr.rel (%p10) target = $region8
  $region5: #{ssast_layer.5} parent=0 // loop_body
    %s14 = ssub.s32 %s9, 1
    %s15 = ssub.s32 %s9, 2
    %s22 = sadd.s32 1, %s17
    %p23 = scmp.ge.s32.totalorder %s22, 1
    %s24 = scalar_select %p23, 0, %s22
    %s25 = sadd.s32 1, %s16
    %s26 = scalar_select %p23, %s25, %s16
    %p27 = scmp.ge.s32.totalorder %s26, 2
    %s28 = scalar_select %p27, 0, %s26
    %s29 = ssub.s32 %s16, %s28
    %s30 = ssub.s32 %s17, %s24
    %s31 = sor.u32 %s29, %s30
    %p32 = scmp.eq.s32.totalorder %s31, 0
    %s34 = sadd.s32 %s33, 1
    %s35 = scalar_select %p32, %s33, %s34
    %p38 = pneg %p32
    %p39 = scmp.eq.s32.totalorder %s9, 1
    %p40 = por %p38, %p39
    %p41 = scmp.ne.s32.totalorder %s33, %s36
    %p42 = scmp.eq.s32.totalorder %s9, 0
    %p43 = por %p41, %p42
    %p44 = scmp.ne.s32.totalorder %s33, %s36
    %p45 = scmp.eq.s32.totalorder %s14, 1
    %p46 = por %p44, %p45
    %p47 = scmp.ne.s32.totalorder %s36, %s37
    %p48 = scmp.eq.s32.totalorder %s14, 0
    %p49 = por %p47, %p48
    %p50 = scmp.ne.s32.totalorder %s36, %s37
    %p51 = scmp.eq.s32.totalorder %s15, 1
    %p52 = por %p50, %p51
    %p54 = scmp.ne.s32.totalorder %s37, %s53
    %p55 = scmp.eq.s32.totalorder %s15, 0
    %p56 = por %p54, %p55
    %s57 = ssub.s32 %s16, %s28
    %p58 = scmp.eq.s32.totalorder %s57, 0
    %s60 = sadd.s32 %s59, 1
    %s61 = scalar_select %p58, %s59, %s60
    %p64 = pneg %p58
    %p65 = scmp.eq.s32.totalorder %s9, 1
    %p66 = por %p64, %p65
    %p67 = scmp.ne.s32.totalorder %s59, %s62
    %p68 = scmp.eq.s32.totalorder %s9, 0
    %p69 = por %p67, %p68
    %p70 = scmp.ne.s32.totalorder %s59, %s62
    %p71 = scmp.eq.s32.totalorder %s14, 1
    %p72 = por %p70, %p71
    %p73 = scmp.ne.s32.totalorder %s62, %s63
    %p74 = scmp.eq.s32.totalorder %s14, 0
    %p75 = por %p73, %p74
    %p76 = scmp.ne.s32.totalorder %s62, %s63
    %p77 = scmp.eq.s32.totalorder %s15, 1
    %p78 = por %p76, %p77
    %p80 = scmp.ne.s32.totalorder %s63, %s79
    %p81 = scmp.eq.s32.totalorder %s15, 0
    %p82 = por %p80, %p81
    %s83 = ssub.s32 %s16, %s28
    %p84 = scmp.eq.s32.totalorder %s83, 0
    %s86 = sadd.s32 %s85, 1
    %s87 = scalar_select %p84, %s85, %s86
    %p90 = pneg %p84
    %p91 = scmp.eq.s32.totalorder %s9, 1
    %p92 = por %p90, %p91
    %p93 = scmp.ne.s32.totalorder %s85, %s88
    %p94 = scmp.eq.s32.totalorder %s9, 0
    %p95 = por %p93, %p94
    %p96 = scmp.ne.s32.totalorder %s85, %s88
    %p97 = scmp.eq.s32.totalorder %s14, 1
    %p98 = por %p96, %p97
    %p99 = scmp.ne.s32.totalorder %s88, %s89
    %p100 = scmp.eq.s32.totalorder %s14, 0
    %p101 = por %p99, %p100
    %p102 = scmp.ne.s32.totalorder %s88, %s89
    %p103 = scmp.eq.s32.totalorder %s15, 1
    %p104 = por %p102, %p103
    %p106 = scmp.ne.s32.totalorder %s89, %s105
    %p107 = scmp.eq.s32.totalorder %s15, 0
    %p108 = por %p106, %p107
    %s109 = ssub.s32 %s16, %s28
    %s110 = ssub.s32 %s17, %s24
    %s111 = sor.u32 %s109, %s110
    %p112 = scmp.eq.s32.totalorder %s111, 0
    %s114 = sadd.s32 %s113, 1
    %s115 = scalar_select %p112, %s113, %s114
    %p118 = pneg %p112
    %p119 = scmp.eq.s32.totalorder %s9, 1
    %p120 = por %p118, %p119
    %p121 = scmp.ne.s32.totalorder %s113, %s116
    %p122 = scmp.eq.s32.totalorder %s9, 0
    %p123 = por %p121, %p122
    %p124 = scmp.ne.s32.totalorder %s113, %s116
    %p125 = scmp.eq.s32.totalorder %s14, 1
    %p126 = por %p124, %p125
    %p127 = scmp.ne.s32.totalorder %s116, %s117
    %p128 = scmp.eq.s32.totalorder %s14, 0
    %p129 = por %p127, %p128
    %p130 = scmp.ne.s32.totalorder %s116, %s117
    %p131 = scmp.eq.s32.totalorder %s15, 1
    %p132 = por %p130, %p131
    %p134 = scmp.ne.s32.totalorder %s117, %s133
    %p135 = scmp.eq.s32.totalorder %s15, 0
    %p136 = por %p134, %p135
    %p137 = scmp.le.s32.totalorder 1, %s9
    %p138 = scmp.lt.s32.totalorder %s9, 3
    %p139 = pnand %p137, %p138
    %p140 = pneg %p139
    // Predicated region
    $region9: #{ssast_layer.5} parent=5 // pred_check
      _
    $region10: #{ssast_layer.5} parent=5 // pred_check_branch
      %142 = sbr.rel (%p139) target = $region12
    $region11: #{ssast_layer.5} parent=5 // pred_region
      %s143 = ssub.s32 %s9, 1
    $region12: #{ssast_layer.5} parent=5 // pred_fallthru
      _
    %p144 = scmp.lt.s32.totalorder %s9, 2
    // Predicated region
    $region13: #{ssast_layer.5} parent=5 // pred_check
      %p145 = pneg %p144
    $region14: #{ssast_layer.5} parent=5 // pred_check_branch
      %147 = sbr.rel (%p145) target = $region16
    $region15: #{ssast_layer.5} parent=5 // pred_region
      // Predicated region
      $region17: #{ssast_layer.5} parent=15 // pred_check
        %p148 = pneg %p43
      $region18: #{ssast_layer.5} parent=15 // pred_check_branch
        %150 = sbr.rel (%p148) target = $region20
      $region19: #{ssast_layer.5} parent=15 // pred_region
        %p151 = scmp.lt.s32.totalorder %s16, 1
        %s152 = scalar_select %p151, %s16, 1
        %p153 = scmp.lt.s32.totalorder %s17, 0
        %s154 = scalar_select %p153, %s17, 0
        %s155 = sadd.s32 %s154, %s152
        %s156 = smul.addr %s155, 8
        %s157 = scalar_lea.vmem %s0, %s156
      $region20: #{ssast_layer.5} parent=15 // pred_fallthru
        _
      // Predicated region
      $region21: #{ssast_layer.5} parent=15 // pred_check
        %p158 = pneg %p69
      $region22: #{ssast_layer.5} parent=15 // pred_check_branch
        %160 = sbr.rel (%p158) target = $region24
      $region23: #{ssast_layer.5} parent=15 // pred_region
        %p161 = scmp.lt.s32.totalorder %s16, 1
        %s162 = scalar_select %p161, %s16, 1
        %s163 = smul.addr %s162, 8
        %s164 = scalar_lea.vmem %s1, %s163
      $region24: #{ssast_layer.5} parent=15 // pred_fallthru
        _
      // Predicated region
      $region25: #{ssast_layer.5} parent=15 // pred_check
        %p165 = pneg %p95
      $region26: #{ssast_layer.5} parent=15 // pred_check_branch
        %167 = sbr.rel (%p165) target = $region28
      $region27: #{ssast_layer.5} parent=15 // pred_region
        %p168 = scmp.lt.s32.totalorder %s16, 1
        %s169 = scalar_select %p168, %s16, 1
        %s170 = smul.addr %s169, 8
        %s171 = scalar_lea.vmem %s2, %s170
      $region28: #{ssast_layer.5} parent=15 // pred_fallthru
        _
    $region16: #{ssast_layer.5} parent=5 // pred_fallthru
      _
    %p172 = scmp.le.s32.totalorder 1, %s9
    %p173 = scmp.lt.s32.totalorder %s9, 3
    %p174 = pnand %p172, %p173
    %p175 = pneg %p174
    // Predicated region
    $region29: #{ssast_layer.5} parent=5 // pred_check
      _
    $region30: #{ssast_layer.5} parent=5 // pred_check_branch
      %177 = sbr.rel (%p174) target = $region32
    $region31: #{ssast_layer.5} parent=5 // pred_region
      %s178 = ssub.s32 %s9, 1
      %p179 = scmp.lt.s32.totalorder %s18, 1
      %s180 = scalar_select %p179, %s18, 1
      %p181 = scmp.lt.s32.totalorder %s19, 0
      %s182 = scalar_select %p181, %s19, 0
      %s183 = sadd.s32 %s182, %s180
      %s184 = smul.addr %s183, 8
      %s185 = scalar_lea.vmem %s0, %s184
      %p186 = pneg %p49
      %p187 = pneg %p46
      %p188 = scmp.lt.s32.totalorder %s18, 1
      %s189 = scalar_select %p188, %s18, 1
      %s190 = smul.addr %s189, 8
      %s191 = scalar_lea.vmem %s1, %s190
      %p192 = pneg %p75
      %p193 = pneg %p72
      %p194 = scmp.lt.s32.totalorder %s18, 1
      %s195 = scalar_select %p194, %s18, 1
      %s196 = smul.addr %s195, 8
      %s197 = scalar_lea.vmem %s2, %s196
      %p198 = pneg %p101
      %p199 = pneg %p98
      %p200 = pneg %p129
      %p201 = pneg %p126
      %p202 = scmp.lt.s32.totalorder %s18, 1
      %s203 = scalar_select %p202, %s18, 1
      %p204 = scmp.lt.s32.totalorder %s19, 0
      %s205 = scalar_select %p204, %s19, 0
      %s206 = sadd.s32 %s205, %s203
      %s207 = smul.addr %s206, 8
      %s208 = scalar_lea.vmem %s3, %s207
      %p209 = scmp.lt.s32.totalorder %s18, 1
      %s210 = scalar_select %p209, %s18, 1
      %p211 = scmp.lt.s32.totalorder %s19, 0
      %s212 = scalar_select %p211, %s19, 0
      %s213 = sadd.s32 %s212, %s210
      %s214 = smul.addr %s213, 8
      %s215 = scalar_lea.vmem %s0, %s214
      %p216 = scmp.lt.s32.totalorder %s18, 1
      %s217 = scalar_select %p216, %s18, 1
      %s218 = smul.addr %s217, 8
      %s219 = scalar_lea.vmem %s1, %s218
      %p220 = scmp.lt.s32.totalorder %s18, 1
      %s221 = scalar_select %p220, %s18, 1
      %s222 = smul.addr %s221, 8
      %s223 = scalar_lea.vmem %s2, %s222
      %p224 = scmp.lt.s32.totalorder %s18, 1
      %s225 = scalar_select %p224, %s18, 1
      %p226 = scmp.lt.s32.totalorder %s19, 0
      %s227 = scalar_select %p226, %s19, 0
      %s228 = sadd.s32 %s227, %s225
      %s229 = smul.addr %s228, 8
      %s230 = scalar_lea.vmem %s3, %s229
      %v231 = vld [vmem:[%s215] sm:$0xff]
      %v232 = vld [vmem:[%s219] sm:$0xff]
      %v233 = vld [vmem:[%s223] sm:$0xff]
      %vm234 = vcmask 64512
      %v236 = vsel %vm234, %v231, 0
      %v239 = vsel %vm234, %v232, 0
      %241 = vmatprep.subr.mxu0 0.0
      %242 = vmatpush1.xpose.msra.mxu0 %v239
      %243 = vmatprep.subr.mxu0 0.0
      %244 = vmatpush1.xpose.msra.mxu0 0.0
      %245 = vmatprep.subr.mxu0 0.0
      %246 = vmatpush1.xpose.msra.mxu0 0.0
      %247 = vmatprep.subr.mxu0 0.0
      %248 = vmatpush1.xpose.msra.mxu0 0.0
      %249 = vmatprep.subr.mxu0 0.0
      %250 = vmatpush1.xpose.msra.mxu0 0.0
      %251 = vmatprep.subr.mxu0 0.0
      %252 = vmatpush1.xpose.msra.mxu0 0.0
      %253 = vmatprep.subr.mxu0 0.0
      %254 = vmatpush1.xpose.msra.mxu0 0.0
      %255 = vmatprep.subr.mxu0 0.0
      %256 = vmatpush1.xpose.msra.mxu0 0.0
      %257 = vmatprep.subr.mxu0 0.0
      %258 = vmatpush1.xpose.msra.mxu0 0.0
      %259 = vmatprep.subr.mxu0 0.0
      %260 = vmatpush1.xpose.msra.mxu0 0.0
      %261 = vmatprep.subr.mxu0 0.0
      %262 = vmatpush1.xpose.msra.mxu0 0.0
      %263 = vmatprep.subr.mxu0 0.0
      %264 = vmatpush1.xpose.msra.mxu0 0.0
      %265 = vmatprep.subr.mxu0 0.0
      %266 = vmatpush1.xpose.msra.mxu0 0.0
      %267 = vmatprep.subr.mxu0 0.0
      %268 = vmatpush1.xpose.msra.mxu0 0.0
      %269 = vmatprep.subr.mxu0 0.0
      %270 = vmatpush1.xpose.msra.mxu0 0.0
      %271 = vmatprep.subr.mxu0 0.0
      %272 = vmatpush1.xpose.msra.mxu0 0.0
      %273 = vmatprep.subr.mxu0 0.0
      %274 = vmatpush1.xpose.msra.mxu0 0.0
      %275 = vmatprep.subr.mxu0 0.0
      %276 = vmatpush1.xpose.msra.mxu0 0.0
      %277 = vmatprep.subr.mxu0 0.0
      %278 = vmatpush1.xpose.msra.mxu0 0.0
      %279 = vmatprep.subr.mxu0 0.0
      %280 = vmatpush1.xpose.msra.mxu0 0.0
      %281 = vmatprep.subr.mxu0 0.0
      %282 = vmatpush1.xpose.msra.mxu0 0.0
      %283 = vmatprep.subr.mxu0 0.0
      %284 = vmatpush1.xpose.msra.mxu0 0.0
      %285 = vmatprep.subr.mxu0 0.0
      %286 = vmatpush1.xpose.msra.mxu0 0.0
      %287 = vmatprep.subr.mxu0 0.0
      %288 = vmatpush1.xpose.msra.mxu0 0.0
      %289 = vmatprep.subr.mxu0 0.0
      %290 = vmatpush1.xpose.msra.mxu0 0.0
      %291 = vmatprep.subr.mxu0 0.0
      %292 = vmatpush1.xpose.msra.mxu0 0.0
      %293 = vmatprep.subr.mxu0 0.0
      %294 = vmatpush1.xpose.msra.mxu0 0.0
      %295 = vmatprep.subr.mxu0 0.0
      %296 = vmatpush1.xpose.msra.mxu0 0.0
      %297 = vmatprep.subr.mxu0 0.0
      %298 = vmatpush1.xpose.msra.mxu0 0.0
      %299 = vmatprep.subr.mxu0 0.0
      %300 = vmatpush1.xpose.msra.mxu0 0.0
      %301 = vmatprep.subr.mxu0 0.0
      %302 = vmatpush1.xpose.msra.mxu0 0.0
      %303 = vmatprep.subr.mxu0 0.0
      %304 = vmatpush1.xpose.msra.mxu0 0.0
      %305 = vmatprep.mubr.f32.mxu0 0.0
      %306 = vmatmul.mubr.f32.gmra.mrb[0].mxu0 %v236
      %v307 = vpop.f32.mrb[0].mxu0
      %v308 = vadd.f32 0.0, %v307
      %v309 = vpop.f32.mrb[0].mxu0
      %310 = vdwg.mxu0
      %v311 = vmul.f32 %v308, 0.35355338
      %v312 = vsel %vm234, %v311, -inf
      %313 = vmax.xlane.f32.xlu0 %v312
      %v314 = vpop.xlane.xlu0 %313
      %v315 = vsub.f32 %v311, %v314
      %v316 = vmul.f32 %v315, 1.442695
      %v317 = vpow.pop %v316
      %v318 = vsel %vm234, %v317, 0.0
      %319 = vadd.xlane.f32.xlu0 %v318
      %v320 = vpop.xlane.xlu0 %319
      %v321 = vrcp.pop %v320
      %v322 = vmul.f32 %v320, %v321
      %v323 = vsub.f32 2.0, %v322
      %v324 = vmul.f32 %v321, %v323
      %v325 = vmul.f32 %v317, %v324
      %v327 = vsel %vm234, %v325, 0
      %329 = vmatprep.subr.mxu0 0.0
      %330 = vmatpush1.msra.mxu0 %v233
      %331 = vmatprep.subr.mxu0 0.0
      %332 = vmatpush1.msra.mxu0 0.0
      %333 = vmatprep.subr.mxu0 0.0
      %334 = vmatpush1.msra.mxu0 0.0
      %335 = vmatprep.subr.mxu0 0.0
      %336 = vmatpush1.msra.mxu0 0.0
      %337 = vmatprep.subr.mxu0 0.0
      %338 = vmatpush1.msra.mxu0 0.0
      %339 = vmatprep.subr.mxu0 0.0
      %340 = vmatpush1.msra.mxu0 0.0
      %341 = vmatprep.subr.mxu0 0.0
      %342 = vmatpush1.msra.mxu0 0.0
      %343 = vmatprep.subr.mxu0 0.0
      %344 = vmatpush1.msra.mxu0 0.0
      %345 = vmatprep.subr.mxu0 0.0
      %346 = vmatpush1.msra.mxu0 0.0
      %347 = vmatprep.subr.mxu0 0.0
      %348 = vmatpush1.msra.mxu0 0.0
      %349 = vmatprep.subr.mxu0 0.0
      %350 = vmatpush1.msra.mxu0 0.0
      %351 = vmatprep.subr.mxu0 0.0
      %352 = vmatpush1.msra.mxu0 0.0
      %353 = vmatprep.subr.mxu0 0.0
      %354 = vmatpush1.msra.mxu0 0.0
      %355 = vmatprep.subr.mxu0 0.0
      %356 = vmatpush1.msra.mxu0 0.0
      %357 = vmatprep.subr.mxu0 0.0
      %358 = vmatpush1.msra.mxu0 0.0
      %359 = vmatprep.subr.mxu0 0.0
      %360 = vmatpush1.msra.mxu0 0.0
      %361 = vmatprep.subr.mxu0 0.0
      %362 = vmatpush1.msra.mxu0 0.0
      %363 = vmatprep.subr.mxu0 0.0
      %364 = vmatpush1.msra.mxu0 0.0
      %365 = vmatprep.subr.mxu0 0.0
      %366 = vmatpush1.msra.mxu0 0.0
      %367 = vmatprep.subr.mxu0 0.0
      %368 = vmatpush1.msra.mxu0 0.0
      %369 = vmatprep.subr.mxu0 0.0
      %370 = vmatpush1.msra.mxu0 0.0
      %371 = vmatprep.subr.mxu0 0.0
      %372 = vmatpush1.msra.mxu0 0.0
      %373 = vmatprep.subr.mxu0 0.0
      %374 = vmatpush1.msra.mxu0 0.0
      %375 = vmatprep.subr.mxu0 0.0
      %376 = vmatpush1.msra.mxu0 0.0
      %377 = vmatprep.subr.mxu0 0.0
      %378 = vmatpush1.msra.mxu0 0.0
      %379 = vmatprep.subr.mxu0 0.0
      %380 = vmatpush1.msra.mxu0 0.0
      %381 = vmatprep.subr.mxu0 0.0
      %382 = vmatpush1.msra.mxu0 0.0
      %383 = vmatprep.subr.mxu0 0.0
      %384 = vmatpush1.msra.mxu0 0.0
      %385 = vmatprep.subr.mxu0 0.0
      %386 = vmatpush1.msra.mxu0 0.0
      %387 = vmatprep.subr.mxu0 0.0
      %388 = vmatpush1.msra.mxu0 0.0
      %389 = vmatprep.subr.mxu0 0.0
      %390 = vmatpush1.msra.mxu0 0.0
      %391 = vmatprep.subr.mxu0 0.0
      %392 = vmatpush1.msra.mxu0 0.0
      %393 = vmatprep.mubr.f32.mxu0 0.0
      %394 = vmatmul.mubr.f32.gmra.mrb[0].mxu0 %v327
      %v395 = vpop.f32.mrb[0].mxu0
      %v396 = vadd.f32 0.0, %v395
      %v397 = vpop.f32.mrb[0].mxu0
      %398 = vdwg.mxu0
      %399 = vrot.lane.b32.xlu0 %v231, 120
      %v400 = vpop.permute.xlu0 %399
      %401 = vrot.lane.b32.xlu0 %v232, 120
      %v402 = vpop.permute.xlu0 %401
      %v403 = vsel %vm234, %v400, 0
      %v405 = vsel %vm234, %v402, 0
      %407 = vmatprep.subr.mxu0 0.0
      %408 = vmatpush1.xpose.msra.mxu0 %v405
      %409 = vmatprep.subr.mxu0 0.0
      %410 = vmatpush1.xpose.msra.mxu0 0.0
      %411 = vmatprep.subr.mxu0 0.0
      %412 = vmatpush1.xpose.msra.mxu0 0.0
      %413 = vmatprep.subr.mxu0 0.0
      %414 = vmatpush1.xpose.msra.mxu0 0.0
      %415 = vmatprep.subr.mxu0 0.0
      %416 = vmatpush1.xpose.msra.mxu0 0.0
      %417 = vmatprep.subr.mxu0 0.0
      %418 = vmatpush1.xpose.msra.mxu0 0.0
      %419 = vmatprep.subr.mxu0 0.0
      %420 = vmatpush1.xpose.msra.mxu0 0.0
      %421 = vmatprep.subr.mxu0 0.0
      %422 = vmatpush1.xpose.msra.mxu0 0.0
      %423 = vmatprep.subr.mxu0 0.0
      %424 = vmatpush1.xpose.msra.mxu0 0.0
      %425 = vmatprep.subr.mxu0 0.0
      %426 = vmatpush1.xpose.msra.mxu0 0.0
      %427 = vmatprep.subr.mxu0 0.0
      %428 = vmatpush1.xpose.msra.mxu0 0.0
      %429 = vmatprep.subr.mxu0 0.0
      %430 = vmatpush1.xpose.msra.mxu0 0.0
      %431 = vmatprep.subr.mxu0 0.0
      %432 = vmatpush1.xpose.msra.mxu0 0.0
      %433 = vmatprep.subr.mxu0 0.0
      %434 = vmatpush1.xpose.msra.mxu0 0.0
      %435 = vmatprep.subr.mxu0 0.0
      %436 = vmatpush1.xpose.msra.mxu0 0.0
      %437 = vmatprep.subr.mxu0 0.0
      %438 = vmatpush1.xpose.msra.mxu0 0.0
      %439 = vmatprep.subr.mxu0 0.0
      %440 = vmatpush1.xpose.msra.mxu0 0.0
      %441 = vmatprep.subr.mxu0 0.0
      %442 = vmatpush1.xpose.msra.mxu0 0.0
      %443 = vmatprep.subr.mxu0 0.0
      %444 = vmatpush1.xpose.msra.mxu0 0.0
      %445 = vmatprep.subr.mxu0 0.0
      %446 = vmatpush1.xpose.msra.mxu0 0.0
      %447 = vmatprep.subr.mxu0 0.0
      %448 = vmatpush1.xpose.msra.mxu0 0.0
      %449 = vmatprep.subr.mxu0 0.0
      %450 = vmatpush1.xpose.msra.mxu0 0.0
      %451 = vmatprep.subr.mxu0 0.0
      %452 = vmatpush1.xpose.msra.mxu0 0.0
      %453 = vmatprep.subr.mxu0 0.0
      %454 = vmatpush1.xpose.msra.mxu0 0.0
      %455 = vmatprep.subr.mxu0 0.0
      %456 = vmatpush1.xpose.msra.mxu0 0.0
      %457 = vmatprep.subr.mxu0 0.0
      %458 = vmatpush1.xpose.msra.mxu0 0.0
      %459 = vmatprep.subr.mxu0 0.0
      %460 = vmatpush1.xpose.msra.mxu0 0.0
      %461 = vmatprep.subr.mxu0 0.0
      %462 = vmatpush1.xpose.msra.mxu0 0.0
      %463 = vmatprep.subr.mxu0 0.0
      %464 = vmatpush1.xpose.msra.mxu0 0.0
      %465 = vmatprep.subr.mxu0 0.0
      %466 = vmatpush1.xpose.msra.mxu0 0.0
      %467 = vmatprep.subr.mxu0 0.0
      %468 = vmatpush1.xpose.msra.mxu0 0.0
      %469 = vmatprep.subr.mxu0 0.0
      %470 = vmatpush1.xpose.msra.mxu0 0.0
      %471 = vmatprep.mubr.f32.mxu0 0.0
      %472 = vmatmul.mubr.f32.gmra.mrb[0].mxu0 %v403
      %v473 = vpop.f32.mrb[0].mxu0
      %v474 = vadd.f32 0.0, %v473
      %v475 = vpop.f32.mrb[0].mxu0
      %476 = vdwg.mxu0
      %v477 = vmul.f32 %v474, 0.35355338
      %v478 = vsel %vm234, %v477, -inf
      %479 = vmax.xlane.f32.xlu0 %v478
      %v480 = vpop.xlane.xlu0 %479
      %v481 = vsub.f32 %v477, %v480
      %v482 = vmul.f32 %v481, 1.442695
      %v483 = vpow.pop %v482
      %v484 = vsel %vm234, %v483, 0.0
      %485 = vadd.xlane.f32.xlu0 %v484
      %v486 = vpop.xlane.xlu0 %485
      %v487 = vrcp.pop %v486
      %v488 = vmul.f32 %v486, %v487
      %v489 = vsub.f32 2.0, %v488
      %v490 = vmul.f32 %v487, %v489
      %v491 = vmul.f32 %v483, %v490
      %493 = vrot.lane.b32.xlu0 %v233, 120
      %v494 = vpop.permute.xlu0 %493
      %v497 = vsel %vm234, %v491, 0
      %499 = vmatprep.subr.mxu0 0.0
      %500 = vmatpush1.msra.mxu0 %v494
      %501 = vmatprep.subr.mxu0 0.0
      %502 = vmatpush1.msra.mxu0 0.0
      %503 = vmatprep.subr.mxu0 0.0
      %504 = vmatpush1.msra.mxu0 0.0
      %505 = vmatprep.subr.mxu0 0.0
      %506 = vmatpush1.msra.mxu0 0.0
      %507 = vmatprep.subr.mxu0 0.0
      %508 = vmatpush1.msra.mxu0 0.0
      %509 = vmatprep.subr.mxu0 0.0
      %510 = vmatpush1.msra.mxu0 0.0
      %511 = vmatprep.subr.mxu0 0.0
      %512 = vmatpush1.msra.mxu0 0.0
      %513 = vmatprep.subr.mxu0 0.0
      %514 = vmatpush1.msra.mxu0 0.0
      %515 = vmatprep.subr.mxu0 0.0
      %516 = vmatpush1.msra.mxu0 0.0
      %517 = vmatprep.subr.mxu0 0.0
      %518 = vmatpush1.msra.mxu0 0.0
      %519 = vmatprep.subr.mxu0 0.0
      %520 = vmatpush1.msra.mxu0 0.0
      %521 = vmatprep.subr.mxu0 0.0
      %522 = vmatpush1.msra.mxu0 0.0
      %523 = vmatprep.subr.mxu0 0.0
      %524 = vmatpush1.msra.mxu0 0.0
      %525 = vmatprep.subr.mxu0 0.0
      %526 = vmatpush1.msra.mxu0 0.0
      %527 = vmatprep.subr.mxu0 0.0
      %528 = vmatpush1.msra.mxu0 0.0
      %529 = vmatprep.subr.mxu0 0.0
      %530 = vmatpush1.msra.mxu0 0.0
      %531 = vmatprep.subr.mxu0 0.0
      %532 = vmatpush1.msra.mxu0 0.0
      %533 = vmatprep.subr.mxu0 0.0
      %534 = vmatpush1.msra.mxu0 0.0
      %535 = vmatprep.subr.mxu0 0.0
      %536 = vmatpush1.msra.mxu0 0.0
      %537 = vmatprep.subr.mxu0 0.0
      %538 = vmatpush1.msra.mxu0 0.0
      %539 = vmatprep.subr.mxu0 0.0
      %540 = vmatpush1.msra.mxu0 0.0
      %541 = vmatprep.subr.mxu0 0.0
      %542 = vmatpush1.msra.mxu0 0.0
      %543 = vmatprep.subr.mxu0 0.0
      %544 = vmatpush1.msra.mxu0 0.0
      %545 = vmatprep.subr.mxu0 0.0
      %546 = vmatpush1.msra.mxu0 0.0
      %547 = vmatprep.subr.mxu0 0.0
      %548 = vmatpush1.msra.mxu0 0.0
      %549 = vmatprep.subr.mxu0 0.0
      %550 = vmatpush1.msra.mxu0 0.0
      %551 = vmatprep.subr.mxu0 0.0
      %552 = vmatpush1.msra.mxu0 0.0
      %553 = vmatprep.subr.mxu0 0.0
      %554 = vmatpush1.msra.mxu0 0.0
      %555 = vmatprep.subr.mxu0 0.0
      %556 = vmatpush1.msra.mxu0 0.0
      %557 = vmatprep.subr.mxu0 0.0
      %558 = vmatpush1.msra.mxu0 0.0
      %559 = vmatprep.subr.mxu0 0.0
      %560 = vmatpush1.msra.mxu0 0.0
      %561 = vmatprep.subr.mxu0 0.0
      %562 = vmatpush1.msra.mxu0 0.0
      %563 = vmatprep.mubr.f32.mxu0 0.0
      %564 = vmatmul.mubr.f32.gmra.mrb[0].mxu0 %v497
      %v565 = vpop.f32.mrb[0].mxu0
      %v566 = vadd.f32 0.0, %v565
      %v567 = vpop.f32.mrb[0].mxu0
      %568 = vdwg.mxu0
      %569 = vrot.lane.b32.xlu0 %v231, 112
      %v570 = vpop.permute.xlu0 %569
      %571 = vrot.lane.b32.xlu0 %v232, 112
      %v572 = vpop.permute.xlu0 %571
      %v573 = vsel %vm234, %v570, 0
      %v575 = vsel %vm234, %v572, 0
      %577 = vmatprep.subr.mxu0 0.0
      %578 = vmatpush1.xpose.msra.mxu0 %v575
      %579 = vmatprep.subr.mxu0 0.0
      %580 = vmatpush1.xpose.msra.mxu0 0.0
      %581 = vmatprep.subr.mxu0 0.0
      %582 = vmatpush1.xpose.msra.mxu0 0.0
      %583 = vmatprep.subr.mxu0 0.0
      %584 = vmatpush1.xpose.msra.mxu0 0.0
      %585 = vmatprep.subr.mxu0 0.0
      %586 = vmatpush1.xpose.msra.mxu0 0.0
      %587 = vmatprep.subr.mxu0 0.0
      %588 = vmatpush1.xpose.msra.mxu0 0.0
      %589 = vmatprep.subr.mxu0 0.0
      %590 = vmatpush1.xpose.msra.mxu0 0.0
      %591 = vmatprep.subr.mxu0 0.0
      %592 = vmatpush1.xpose.msra.mxu0 0.0
      %593 = vmatprep.subr.mxu0 0.0
      %594 = vmatpush1.xpose.msra.mxu0 0.0
      %595 = vmatprep.subr.mxu0 0.0
      %596 = vmatpush1.xpose.msra.mxu0 0.0
      %597 = vmatprep.subr.mxu0 0.0
      %598 = vmatpush1.xpose.msra.mxu0 0.0
      %599 = vmatprep.subr.mxu0 0.0
      %600 = vmatpush1.xpose.msra.mxu0 0.0
      %601 = vmatprep.subr.mxu0 0.0
      %602 = vmatpush1.xpose.msra.mxu0 0.0
      %603 = vmatprep.subr.mxu0 0.0
      %604 = vmatpush1.xpose.msra.mxu0 0.0
      %605 = vmatprep.subr.mxu0 0.0
      %606 = vmatpush1.xpose.msra.mxu0 0.0
      %607 = vmatprep.subr.mxu0 0.0
      %608 = vmatpush1.xpose.msra.mxu0 0.0
      %609 = vmatprep.subr.mxu0 0.0
      %610 = vmatpush1.xpose.msra.mxu0 0.0
      %611 = vmatprep.subr.mxu0 0.0
      %612 = vmatpush1.xpose.msra.mxu0 0.0
      %613 = vmatprep.subr.mxu0 0.0
      %614 = vmatpush1.xpose.msra.mxu0 0.0
      %615 = vmatprep.subr.mxu0 0.0
      %616 = vmatpush1.xpose.msra.mxu0 0.0
      %617 = vmatprep.subr.mxu0 0.0
      %618 = vmatpush1.xpose.msra.mxu0 0.0
      %619 = vmatprep.subr.mxu0 0.0
      %620 = vmatpush1.xpose.msra.mxu0 0.0
      %621 = vmatprep.subr.mxu0 0.0
      %622 = vmatpush1.xpose.msra.mxu0 0.0
      %623 = vmatprep.subr.mxu0 0.0
      %624 = vmatpush1.xpose.msra.mxu0 0.0
      %625 = vmatprep.subr.mxu0 0.0
      %626 = vmatpush1.xpose.msra.mxu0 0.0
      %627 = vmatprep.subr.mxu0 0.0
      %628 = vmatpush1.xpose.msra.mxu0 0.0
      %629 = vmatprep.subr.mxu0 0.0
      %630 = vmatpush1.xpose.msra.mxu0 0.0
      %631 = vmatprep.subr.mxu0 0.0
      %632 = vmatpush1.xpose.msra.mxu0 0.0
      %633 = vmatprep.subr.mxu0 0.0
      %634 = vmatpush1.xpose.msra.mxu0 0.0
      %635 = vmatprep.subr.mxu0 0.0
      %636 = vmatpush1.xpose.msra.mxu0 0.0
      %637 = vmatprep.subr.mxu0 0.0
      %638 = vmatpush1.xpose.msra.mxu0 0.0
      %639 = vmatprep.subr.mxu0 0.0
      %640 = vmatpush1.xpose.msra.mxu0 0.0
      %641 = vmatprep.mubr.f32.mxu0 0.0
      %642 = vmatmul.mubr.f32.gmra.mrb[0].mxu0 %v573
      %v643 = vpop.f32.mrb[0].mxu0
      %v644 = vadd.f32 0.0, %v643
      %v645 = vpop.f32.mrb[0].mxu0
      %646 = vdwg.mxu0
      %v647 = vmul.f32 %v644, 0.35355338
      %v648 = vsel %vm234, %v647, -inf
      %649 = vmax.xlane.f32.xlu0 %v648
      %v650 = vpop.xlane.xlu0 %649
      %v651 = vsub.f32 %v647, %v650
      %v652 = vmul.f32 %v651, 1.442695
      %v653 = vpow.pop %v652
      %v654 = vsel %vm234, %v653, 0.0
      %655 = vadd.xlane.f32.xlu0 %v654
      %v656 = vpop.xlane.xlu0 %655
      %v657 = vrcp.pop %v656
      %v658 = vmul.f32 %v656, %v657
      %v659 = vsub.f32 2.0, %v658
      %v660 = vmul.f32 %v657, %v659
      %v661 = vmul.f32 %v653, %v660
      %662 = vrot.lane.b32.xlu0 %v233, 112
      %v663 = vpop.permute.xlu0 %662
      %v666 = vsel %vm234, %v661, 0
      %668 = vmatprep.subr.mxu0 0.0
      %669 = vmatpush1.msra.mxu0 %v663
      %670 = vmatprep.subr.mxu0 0.0
      %671 = vmatpush1.msra.mxu0 0.0
      %672 = vmatprep.subr.mxu0 0.0
      %673 = vmatpush1.msra.mxu0 0.0
      %674 = vmatprep.subr.mxu0 0.0
      %675 = vmatpush1.msra.mxu0 0.0
      %676 = vmatprep.subr.mxu0 0.0
      %677 = vmatpush1.msra.mxu0 0.0
      %678 = vmatprep.subr.mxu0 0.0
      %679 = vmatpush1.msra.mxu0 0.0
      %680 = vmatprep.subr.mxu0 0.0
      %681 = vmatpush1.msra.mxu0 0.0
      %682 = vmatprep.subr.mxu0 0.0
      %683 = vmatpush1.msra.mxu0 0.0
      %684 = vmatprep.subr.mxu0 0.0
      %685 = vmatpush1.msra.mxu0 0.0
      %686 = vmatprep.subr.mxu0 0.0
      %687 = vmatpush1.msra.mxu0 0.0
      %688 = vmatprep.subr.mxu0 0.0
      %689 = vmatpush1.msra.mxu0 0.0
      %690 = vmatprep.subr.mxu0 0.0
      %691 = vmatpush1.msra.mxu0 0.0
      %692 = vmatprep.subr.mxu0 0.0
      %693 = vmatpush1.msra.mxu0 0.0
      %694 = vmatprep.subr.mxu0 0.0
      %695 = vmatpush1.msra.mxu0 0.0
      %696 = vmatprep.subr.mxu0 0.0
      %697 = vmatpush1.msra.mxu0 0.0
      %698 = vmatprep.subr.mxu0 0.0
      %699 = vmatpush1.msra.mxu0 0.0
      %700 = vmatprep.subr.mxu0 0.0
      %701 = vmatpush1.msra.mxu0 0.0
      %702 = vmatprep.subr.mxu0 0.0
      %703 = vmatpush1.msra.mxu0 0.0
      %704 = vmatprep.subr.mxu0 0.0
      %705 = vmatpush1.msra.mxu0 0.0
      %706 = vmatprep.subr.mxu0 0.0
      %707 = vmatpush1.msra.mxu0 0.0
      %708 = vmatprep.subr.mxu0 0.0
      %709 = vmatpush1.msra.mxu0 0.0
      %710 = vmatprep.subr.mxu0 0.0
      %711 = vmatpush1.msra.mxu0 0.0
      %712 = vmatprep.subr.mxu0 0.0
      %713 = vmatpush1.msra.mxu0 0.0
      %714 = vmatprep.subr.mxu0 0.0
      %715 = vmatpush1.msra.mxu0 0.0
      %716 = vmatprep.subr.mxu0 0.0
      %717 = vmatpush1.msra.mxu0 0.0
      %718 = vmatprep.subr.mxu0 0.0
      %719 = vmatpush1.msra.mxu0 0.0
      %720 = vmatprep.subr.mxu0 0.0
      %721 = vmatpush1.msra.mxu0 0.0
      %722 = vmatprep.subr.mxu0 0.0
      %723 = vmatpush1.msra.mxu0 0.0
      %724 = vmatprep.subr.mxu0 0.0
      %725 = vmatpush1.msra.mxu0 0.0
      %726 = vmatprep.subr.mxu0 0.0
      %727 = vmatpush1.msra.mxu0 0.0
      %728 = vmatprep.subr.mxu0 0.0
      %729 = vmatpush1.msra.mxu0 0.0
      %730 = vmatprep.subr.mxu0 0.0
      %731 = vmatpush1.msra.mxu0 0.0
      %732 = vmatprep.mubr.f32.mxu0 0.0
      %733 = vmatmul.mubr.f32.gmra.mrb[0].mxu0 %v666
      %v734 = vpop.f32.mrb[0].mxu0
      %v735 = vadd.f32 0.0, %v734
      %v736 = vpop.f32.mrb[0].mxu0
      %737 = vdwg.mxu0
      %738 = vrot.lane.b32.xlu0 %v231, 104
      %v739 = vpop.permute.xlu0 %738
      %740 = vrot.lane.b32.xlu0 %v232, 104
      %v741 = vpop.permute.xlu0 %740
      %v742 = vsel %vm234, %v739, 0
      %v744 = vsel %vm234, %v741, 0
      %746 = vmatprep.subr.mxu0 0.0
      %747 = vmatpush1.xpose.msra.mxu0 %v744
      %748 = vmatprep.subr.mxu0 0.0
      %749 = vmatpush1.xpose.msra.mxu0 0.0
      %750 = vmatprep.subr.mxu0 0.0
      %751 = vmatpush1.xpose.msra.mxu0 0.0
      %752 = vmatprep.subr.mxu0 0.0
      %753 = vmatpush1.xpose.msra.mxu0 0.0
      %754 = vmatprep.subr.mxu0 0.0
      %755 = vmatpush1.xpose.msra.mxu0 0.0
      %756 = vmatprep.subr.mxu0 0.0
      %757 = vmatpush1.xpose.msra.mxu0 0.0
      %758 = vmatprep.subr.mxu0 0.0
      %759 = vmatpush1.xpose.msra.mxu0 0.0
      %760 = vmatprep.subr.mxu0 0.0
      %761 = vmatpush1.xpose.msra.mxu0 0.0
      %762 = vmatprep.subr.mxu0 0.0
      %763 = vmatpush1.xpose.msra.mxu0 0.0
      %764 = vmatprep.subr.mxu0 0.0
      %765 = vmatpush1.xpose.msra.mxu0 0.0
      %766 = vmatprep.subr.mxu0 0.0
      %767 = vmatpush1.xpose.msra.mxu0 0.0
      %768 = vmatprep.subr.mxu0 0.0
      %769 = vmatpush1.xpose.msra.mxu0 0.0
      %770 = vmatprep.subr.mxu0 0.0
      %771 = vmatpush1.xpose.msra.mxu0 0.0
      %772 = vmatprep.subr.mxu0 0.0
      %773 = vmatpush1.xpose.msra.mxu0 0.0
      %774 = vmatprep.subr.mxu0 0.0
      %775 = vmatpush1.xpose.msra.mxu0 0.0
      %776 = vmatprep.subr.mxu0 0.0
      %777 = vmatpush1.xpose.msra.mxu0 0.0
      %778 = vmatprep.subr.mxu0 0.0
      %779 = vmatpush1.xpose.msra.mxu0 0.0
      %780 = vmatprep.subr.mxu0 0.0
      %781 = vmatpush1.xpose.msra.mxu0 0.0
      %782 = vmatprep.subr.mxu0 0.0
      %783 = vmatpush1.xpose.msra.mxu0 0.0
      %784 = vmatprep.subr.mxu0 0.0
      %785 = vmatpush1.xpose.msra.mxu0 0.0
      %786 = vmatprep.subr.mxu0 0.0
      %787 = vmatpush1.xpose.msra.mxu0 0.0
      %788 = vmatprep.subr.mxu0 0.0
      %789 = vmatpush1.xpose.msra.mxu0 0.0
      %790 = vmatprep.subr.mxu0 0.0
      %791 = vmatpush1.xpose.msra.mxu0 0.0
      %792 = vmatprep.subr.mxu0 0.0
      %793 = vmatpush1.xpose.msra.mxu0 0.0
      %794 = vmatprep.subr.mxu0 0.0
      %795 = vmatpush1.xpose.msra.mxu0 0.0
      %796 = vmatprep.subr.mxu0 0.0
      %797 = vmatpush1.xpose.msra.mxu0 0.0
      %798 = vmatprep.subr.mxu0 0.0
      %799 = vmatpush1.xpose.msra.mxu0 0.0
      %800 = vmatprep.subr.mxu0 0.0
      %801 = vmatpush1.xpose.msra.mxu0 0.0
      %802 = vmatprep.subr.mxu0 0.0
      %803 = vmatpush1.xpose.msra.mxu0 0.0
      %804 = vmatprep.subr.mxu0 0.0
      %805 = vmatpush1.xpose.msra.mxu0 0.0
      %806 = vmatprep.subr.mxu0 0.0
      %807 = vmatpush1.xpose.msra.mxu0 0.0
      %808 = vmatprep.subr.mxu0 0.0
      %809 = vmatpush1.xpose.msra.mxu0 0.0
      %810 = vmatprep.mubr.f32.mxu0 0.0
      %811 = vmatmul.mubr.f32.gmra.mrb[0].mxu0 %v742
      %v812 = vpop.f32.mrb[0].mxu0
      %v813 = vadd.f32 0.0, %v812
      %v814 = vpop.f32.mrb[0].mxu0
      %815 = vdwg.mxu0
      %v816 = vmul.f32 %v813, 0.35355338
      %v817 = vsel %vm234, %v816, -inf
      %818 = vmax.xlane.f32.xlu0 %v817
      %v819 = vpop.xlane.xlu0 %818
      %v820 = vsub.f32 %v816, %v819
      %v821 = vmul.f32 %v820, 1.442695
      %v822 = vpow.pop %v821
      %v823 = vsel %vm234, %v822, 0.0
      %824 = vadd.xlane.f32.xlu0 %v823
      %v825 = vpop.xlane.xlu0 %824
      %v826 = vrcp.pop %v825
      %v827 = vmul.f32 %v825, %v826
      %v828 = vsub.f32 2.0, %v827
      %v829 = vmul.f32 %v826, %v828
      %v830 = vmul.f32 %v822, %v829
      %831 = vrot.lane.b32.xlu0 %v233, 104
      %v832 = vpop.permute.xlu0 %831
      %v835 = vsel %vm234, %v830, 0
      %837 = vmatprep.subr.mxu0 0.0
      %838 = vmatpush1.msra.mxu0 %v832
      %839 = vmatprep.subr.mxu0 0.0
      %840 = vmatpush1.msra.mxu0 0.0
      %841 = vmatprep.subr.mxu0 0.0
      %842 = vmatpush1.msra.mxu0 0.0
      %843 = vmatprep.subr.mxu0 0.0
      %844 = vmatpush1.msra.mxu0 0.0
      %845 = vmatprep.subr.mxu0 0.0
      %846 = vmatpush1.msra.mxu0 0.0
      %847 = vmatprep.subr.mxu0 0.0
      %848 = vmatpush1.msra.mxu0 0.0
      %849 = vmatprep.subr.mxu0 0.0
      %850 = vmatpush1.msra.mxu0 0.0
      %851 = vmatprep.subr.mxu0 0.0
      %852 = vmatpush1.msra.mxu0 0.0
      %853 = vmatprep.subr.mxu0 0.0
      %854 = vmatpush1.msra.mxu0 0.0
      %855 = vmatprep.subr.mxu0 0.0
      %856 = vmatpush1.msra.mxu0 0.0
      %857 = vmatprep.subr.mxu0 0.0
      %858 = vmatpush1.msra.mxu0 0.0
      %859 = vmatprep.subr.mxu0 0.0
      %860 = vmatpush1.msra.mxu0 0.0
      %861 = vmatprep.subr.mxu0 0.0
      %862 = vmatpush1.msra.mxu0 0.0
      %863 = vmatprep.subr.mxu0 0.0
      %864 = vmatpush1.msra.mxu0 0.0
      %865 = vmatprep.subr.mxu0 0.0
      %866 = vmatpush1.msra.mxu0 0.0
      %867 = vmatprep.subr.mxu0 0.0
      %868 = vmatpush1.msra.mxu0 0.0
      %869 = vmatprep.subr.mxu0 0.0
      %870 = vmatpush1.msra.mxu0 0.0
      %871 = vmatprep.subr.mxu0 0.0
      %872 = vmatpush1.msra.mxu0 0.0
      %873 = vmatprep.subr.mxu0 0.0
      %874 = vmatpush1.msra.mxu0 0.0
      %875 = vmatprep.subr.mxu0 0.0
      %876 = vmatpush1.msra.mxu0 0.0
      %877 = vmatprep.subr.mxu0 0.0
      %878 = vmatpush1.msra.mxu0 0.0
      %879 = vmatprep.subr.mxu0 0.0
      %880 = vmatpush1.msra.mxu0 0.0
      %881 = vmatprep.subr.mxu0 0.0
      %882 = vmatpush1.msra.mxu0 0.0
      %883 = vmatprep.subr.mxu0 0.0
      %884 = vmatpush1.msra.mxu0 0.0
      %885 = vmatprep.subr.mxu0 0.0
      %886 = vmatpush1.msra.mxu0 0.0
      %887 = vmatprep.subr.mxu0 0.0
      %888 = vmatpush1.msra.mxu0 0.0
      %889 = vmatprep.subr.mxu0 0.0
      %890 = vmatpush1.msra.mxu0 0.0
      %891 = vmatprep.subr.mxu0 0.0
      %892 = vmatpush1.msra.mxu0 0.0
      %893 = vmatprep.subr.mxu0 0.0
      %894 = vmatpush1.msra.mxu0 0.0
      %895 = vmatprep.subr.mxu0 0.0
      %896 = vmatpush1.msra.mxu0 0.0
      %897 = vmatprep.subr.mxu0 0.0
      %898 = vmatpush1.msra.mxu0 0.0
      %899 = vmatprep.subr.mxu0 0.0
      %900 = vmatpush1.msra.mxu0 0.0
      %901 = vmatprep.mubr.f32.mxu0 0.0
      %902 = vmatmul.mubr.f32.gmra.mrb[0].mxu0 %v835
      %v903 = vpop.f32.mrb[0].mxu0
      %v904 = vadd.f32 0.0, %v903
      %v905 = vpop.f32.mrb[0].mxu0
      %906 = vdwg.mxu0
      %908 = vrot.lane.b32.xlu0 %v566, 8
      %v909 = vpop.permute.xlu0 %908
      %912 = vrot.lane.b32.xlu0 %v735, 16
      %v913 = vpop.permute.xlu0 %912
      %916 = vrot.lane.b32.xlu0 %v904, 24
      %v917 = vpop.permute.xlu0 %916
      %v919 = vsel %vm234, %v396, %v909
      %vm920 = vcmask 130048
      %v921 = vsel %vm920, %v919, %v913
      %vm922 = vcmask 195584
      %v923 = vsel %vm922, %v921, %v917
      %vm924 = vcmask 261120
      %925 = vst.msk [vmem:[%s230] sm:$0xff] %vm924, %v923
      %p926 = scmp.lt.s32.totalorder %s18, 1
      %s927 = scalar_select %p926, %s18, 1
      %p928 = scmp.lt.s32.totalorder %s19, 0
      %s929 = scalar_select %p928, %s19, 0
      %s930 = sadd.s32 %s929, %s927
      %s931 = smul.addr %s930, 8
      %s932 = scalar_lea.vmem %s3, %s931
      // Predicated region
      $region33: #{ssast_layer.5} parent=31 // pred_check
        %p933 = pneg %p126
      $region34: #{ssast_layer.5} parent=31 // pred_check_branch
        %935 = sbr.rel (%p933) target = $region36
      $region35: #{ssast_layer.5} parent=31 // pred_region
        _
      $region36: #{ssast_layer.5} parent=31 // pred_fallthru
        _
    $region32: #{ssast_layer.5} parent=5 // pred_fallthru
      _
    %p936 = scmp.le.s32.totalorder 2, %s9
    // Predicated region
    $region37: #{ssast_layer.5} parent=5 // pred_check
      %p937 = pneg %p936
    $region38: #{ssast_layer.5} parent=5 // pred_check_branch
      %939 = sbr.rel (%p937) target = $region40
    $region39: #{ssast_layer.5} parent=5 // pred_region
      %s940 = ssub.s32 %s9, 2
      // Predicated region
      $region41: #{ssast_layer.5} parent=39 // pred_check
        %p941 = pneg %p132
      $region42: #{ssast_layer.5} parent=39 // pred_check_branch
        %943 = sbr.rel (%p941) target = $region44
      $region43: #{ssast_layer.5} parent=39 // pred_region
        %p944 = scmp.lt.s32.totalorder %s20, 1
        %s945 = scalar_select %p944, %s20, 1
        %p946 = scmp.lt.s32.totalorder %s21, 0
        %s947 = scalar_select %p946, %s21, 0
        %s948 = sadd.s32 %s947, %s945
        %s949 = smul.addr %s948, 8
        %s950 = scalar_lea.vmem %s3, %s949
      $region44: #{ssast_layer.5} parent=39 // pred_fallthru
        _
    $region40: #{ssast_layer.5} parent=5 // pred_fallthru
      _
  $region6: #{ssast_layer.5} parent=0 // loop_footer
    %s13 = sadd.s32 1, %s9
  $region7: #{ssast_layer.5} parent=0 // loop_footer_branch
    %8 = sbr.rel target = $region3
  $region8: #{ssast_layer.5} parent=0 // loop_exit
    _

// kernel: ssast_layer.7
$region0: #{ssast_layer.7}
  #allocation0 [shape = 'u32[]', space=smem, size = 0x4, offset = 0x4, fixed_abs, tag = 'smem constant byte address 0x4 - core index']
  #allocation1 [shape = 'u32[144,128]{1,0:T(1,128)}', space=vmem, size = 0x12000, scoped, tag = 'internal scratch']
  #allocation2 [shape = 'f32[16,32]{1,0:T(8,128)}', space=vmem, size = 0x2000, scoped, tag = 'scratch operand']
  #allocation3 [shape = 'f32[16,32]{1,0:T(8,128)}', space=vmem, size = 0x2000, scoped, tag = 'scratch operand']
  %s0 = inlined_call_operand.vmem [shape: f32[16,32], index: 0, kind: input, shape index: {}, may-alias: {0,7}]
  %s1 = inlined_call_operand.vmem [shape: f32[1,32], index: 1, kind: input, shape index: {}]
  %s2 = inlined_call_operand.vmem [shape: f32[1,32], index: 2, kind: input, shape index: {}]
  %s3 = inlined_call_operand.vmem [shape: f32[32,64], index: 3, kind: input, shape index: {}]
  %s4 = inlined_call_operand.vmem [shape: f32[1,64], index: 4, kind: input, shape index: {}]
  %s5 = inlined_call_operand.vmem [shape: f32[64,32], index: 5, kind: input, shape index: {}]
  %s6 = inlined_call_operand.vmem [shape: f32[1,32], index: 6, kind: input, shape index: {}]
  %s7 = inlined_call_operand.vmem [shape: f32[16,32], index: 7, kind: output, shape index: {}, may-alias: {0,7}]
  %s8 = sld [smem:[#allocation0]]
  $region46: #{ssast_layer.7} parent=0
    _
  %s10 = ssub.s32 1, %s8
  %s11 = scalar_select 0, %s10, %s8
  // Predicated region
  $region2: #{ssast_layer.7} parent=0 // pred_check
    _
  $region3: #{ssast_layer.7} parent=0 // pred_check_branch
    %13 = sbr.rel (0) target = $region5
  $region4: #{ssast_layer.7} parent=0 // pred_region
    _
  $region5: #{ssast_layer.7} parent=0 // pred_fallthru
    _
  // Predicated region
  $region6: #{ssast_layer.7} parent=0 // pred_check
    _
  $region7: #{ssast_layer.7} parent=0 // pred_check_branch
    %15 = sbr.rel (0) target = $region9
  $region8: #{ssast_layer.7} parent=0 // pred_region
    _
  $region9: #{ssast_layer.7} parent=0 // pred_fallthru
    _
  // Predicated region
  $region10: #{ssast_layer.7} parent=0 // pred_check
    _
  $region11: #{ssast_layer.7} parent=0 // pred_check_branch
    %17 = sbr.rel (0) target = $region13
  $region12: #{ssast_layer.7} parent=0 // pred_region
    _
  $region13: #{ssast_layer.7} parent=0 // pred_fallthru
    _
  // Predicated region
  $region14: #{ssast_layer.7} parent=0 // pred_check
    _
  $region15: #{ssast_layer.7} parent=0 // pred_check_branch
    %19 = sbr.rel (0) target = $region17
  $region16: #{ssast_layer.7} parent=0 // pred_region
    _
  $region17: #{ssast_layer.7} parent=0 // pred_fallthru
    _
  // Predicated region
  $region18: #{ssast_layer.7} parent=0 // pred_check
    _
  $region19: #{ssast_layer.7} parent=0 // pred_check_branch
    %21 = sbr.rel (0) target = $region21
  $region20: #{ssast_layer.7} parent=0 // pred_region
    _
  $region21: #{ssast_layer.7} parent=0 // pred_fallthru
    _
  // Predicated region
  $region22: #{ssast_layer.7} parent=0 // pred_check
    _
  $region23: #{ssast_layer.7} parent=0 // pred_check_branch
    %23 = sbr.rel (0) target = $region25
  $region24: #{ssast_layer.7} parent=0 // pred_region
    _
  $region25: #{ssast_layer.7} parent=0 // pred_fallthru
    _
  // Predicated region
  $region26: #{ssast_layer.7} parent=0 // pred_check
    _
  $region27: #{ssast_layer.7} parent=0 // pred_check_branch
    %25 = sbr.rel (0) target = $region29
  $region28: #{ssast_layer.7} parent=0 // pred_region
    _
  $region29: #{ssast_layer.7} parent=0 // pred_fallthru
    _
  %p26 = scmp.eq.s32.totalorder 0, 0
  // Predicated region
  $region30: #{ssast_layer.7} parent=0 // pred_check
    %p27 = pneg %p26
  $region31: #{ssast_layer.7} parent=0 // pred_check_branch
    %29 = sbr.rel (%p27) target = $region33
  $region32: #{ssast_layer.7} parent=0 // pred_region
    %v30 = vld [vmem:[%s0] sm:$0xff]
    %v31 = vld [vmem:[%s0 + $0x8] sm:$0xff]
    %v32 = vld [vmem:[%s1] sm:$0x1]
    %v33 = vld [vmem:[%s2] sm:$0x1]
    %vm34 = vcmask 261120
    %v35 = vsel %vm34, %v30, 0.0
    %36 = vadd.xlane.f32.xlu0 %v35
    %v37 = vpop.xlane.xlu0 %36
    %v38 = vsel %vm34, %v31, 0.0
    %39 = vadd.xlane.f32.xlu0 %v38
    %v40 = vpop.xlane.xlu0 %39
    %v41 = vrcp.pop 32.0
    %v42 = vmul.f32 %v37, %v41
    %v43 = vmul.f32 %v40, %v41
    %v44 = vsub.f32 %v30, %v42
    %v45 = vsub.f32 %v31, %v43
    %v46 = vmul.f32 %v44, %v44
    %v47 = vmul.f32 %v45, %v45
    %v48 = vsel %vm34, %v46, 0.0
    %49 = vadd.xlane.f32.xlu0 %v48
    %v50 = vpop.xlane.xlu0 %49
    %v51 = vsel %vm34, %v47, 0.0
    %52 = vadd.xlane.f32.xlu0 %v51
    %v53 = vpop.xlane.xlu0 %52
    %v54 = vmul.f32 %v50, %v41
    %v55 = vmul.f32 %v53, %v41
    %v56 = vadd.f32 %v54, 1e-12
    %v57 = vadd.f32 %v55, 1e-12
    %v58 = vrsqrt.pop %v56
    %v59 = vrsqrt.pop %v57
    %v60 = vmul.f32 %v44, %v58
    %v61 = vmul.f32 %v45, %v59
    %v63 = vlaneseq
    %v64 = vshrl.u32 %v63, 7
    %v65 = vsub.s32 0, %v64
    %v66 = vrot.slane %v32, %v65
    %v68 = vmul.f32 %v60, %v66
    %v69 = vmul.f32 %v61, %v66
    %v71 = vlaneseq
    %v72 = vshrl.u32 %v71, 7
    %v73 = vsub.s32 0, %v72
    %v74 = vrot.slane %v33, %v73
    %v76 = vadd.f32 %v68, %v74
    %v77 = vadd.f32 %v69, %v74
    %78 = vst.msk [vmem:[#allocation2] sm:$0xff] %vm34, %v76
    %79 = vst.msk [vmem:[#allocation2 + $0x8] sm:$0xff] %vm34, %v77
    %80 = vst.msk [vmem:[#allocation3] sm:$0xff] %vm34, 0.0
    %81 = vst.msk [vmem:[#allocation3 + $0x8] sm:$0xff] %vm34, 0.0
  $region33: #{ssast_layer.7} parent=0 // pred_fallthru
    _
  %v82 = vld [vmem:[#allocation2] sm:$0xff]
  %v83 = vld [vmem:[#allocation2 + $0x8] sm:$0xff]
  %v84 = vld [vmem:[%s3] sm:$0xff]
  %v85 = vld [vmem:[%s3 + $0x8] sm:$0xff]
  %v86 = vld [vmem:[%s3 + $0x10] sm:$0xff]
  %v87 = vld [vmem:[%s3 + $0x18] sm:$0xff]
  %v88 = vld [vmem:[%s4] sm:$0x1]
  %v90 = vlaneseq
  %v91 = vshrl.u32 %v90, 7
  %v92 = vsub.s32 0, %v91
  %v93 = vrot.slane %v88, %v92
  %vm95 = vcmask 261120
  %v97 = vsel %vm95, %v82, 0
  %v100 = vsel %vm95, %v83, 0
  %102 = vmatprep.subr.mxu0 0.0
  %103 = vmatpush1.msra.mxu0 %v84
  %104 = vmatprep.subr.mxu0 0.0
  %105 = vmatpush1.msra.mxu0 %v85
  %106 = vmatprep.subr.mxu0 0.0
  %107 = vmatpush1.msra.mxu0 %v86
  %108 = vmatprep.subr.mxu0 0.0
  %109 = vmatpush1.msra.mxu0 %v87
  %110 = vmatprep.subr.mxu0 0.0
  %111 = vmatpush1.msra.mxu0 0.0
  %112 = vmatprep.subr.mxu0 0.0
  %113 = vmatpush1.msra.mxu0 0.0
  %114 = vmatprep.subr.mxu0 0.0
  %115 = vmatpush1.msra.mxu0 0.0
  %116 = vmatprep.subr.mxu0 0.0
  %117 = vmatpush1.msra.mxu0 0.0
  %118 = vmatprep.subr.mxu0 0.0
  %119 = vmatpush1.msra.mxu0 0.0
  %120 = vmatprep.subr.mxu0 0.0
  %121 = vmatpush1.msra.mxu0 0.0
  %122 = vmatprep.subr.mxu0 0.0
  %123 = vmatpush1.msra.mxu0 0.0
  %124 = vmatprep.subr.mxu0 0.0
  %125 = vmatpush1.msra.mxu0 0.0
  %126 = vmatprep.subr.mxu0 0.0
  %127 = vmatpush1.msra.mxu0 0.0
  %128 = vmatprep.subr.mxu0 0.0
  %129 = vmatpush1.msra.mxu0 0.0
  %130 = vmatprep.subr.mxu0 0.0
  %131 = vmatpush1.msra.mxu0 0.0
  %132 = vmatprep.subr.mxu0 0.0
  %133 = vmatpush1.msra.mxu0 0.0
  %134 = vmatprep.subr.mxu0 0.0
  %135 = vmatpush1.msra.mxu0 0.0
  %136 = vmatprep.subr.mxu0 0.0
  %137 = vmatpush1.msra.mxu0 0.0
  %138 = vmatprep.subr.mxu0 0.0
  %139 = vmatpush1.msra.mxu0 0.0
  %140 = vmatprep.subr.mxu0 0.0
  %141 = vmatpush1.msra.mxu0 0.0
  %142 = vmatprep.subr.mxu0 0.0
  %143 = vmatpush1.msra.mxu0 0.0
  %144 = vmatprep.subr.mxu0 0.0
  %145 = vmatpush1.msra.mxu0 0.0
  %146 = vmatprep.subr.mxu0 0.0
  %147 = vmatpush1.msra.mxu0 0.0
  %148 = vmatprep.subr.mxu0 0.0
  %149 = vmatpush1.msra.mxu0 0.0
  %150 = vmatprep.subr.mxu0 0.0
  %151 = vmatpush1.msra.mxu0 0.0
  %152 = vmatprep.subr.mxu0 0.0
  %153 = vmatpush1.msra.mxu0 0.0
  %154 = vmatprep.subr.mxu0 0.0
  %155 = vmatpush1.msra.mxu0 0.0
  %156 = vmatprep.subr.mxu0 0.0
  %157 = vmatpush1.msra.mxu0 0.0
  %158 = vmatprep.subr.mxu0 0.0
  %159 = vmatpush1.msra.mxu0 0.0
  %160 = vmatprep.subr.mxu0 0.0
  %161 = vmatpush1.msra.mxu0 0.0
  %162 = vmatprep.subr.mxu0 0.0
  %163 = vmatpush1.msra.mxu0 0.0
  %164 = vmatprep.subr.mxu0 0.0
  %165 = vmatpush1.msra.mxu0 0.0
  %166 = vmatprep.mubr.f32.mxu0 0.0
  %167 = vmatmul.mubr.f32.gmra.mrb[0].mxu0 %v97
  %v168 = vpop.f32.mrb[0].mxu0
  %v169 = vadd.f32 %v93, %v168
  %v170 = vpop.f32.mrb[0].mxu0
  %171 = vmatprep.mubr.f32.mxu0 0.0
  %172 = vmatmul.mubr.f32.gmra.mrb[0].mxu0 %v100
  %v173 = vpop.f32.mrb[0].mxu0
  %v174 = vadd.f32 %v93, %v173
  %v175 = vpop.f32.mrb[0].mxu0
  %176 = vdwg.mxu0
  %v177 = vmul.f32 %v169, 0.70710677
  %v178 = vmul.f32 %v174, 0.70710677
  %vm179 = vcmp.lt.f32.partialorder %v177, 0.0
  %vm180 = vcmp.lt.f32.partialorder %v178, 0.0
  %v181 = vsel %vm179, -1.0, 1.0
  %v182 = vsel %vm180, -1.0, 1.0
  %v183 = vand.u32 2147483647, %v177
  %v184 = vand.u32 2147483647, %v178
  %v185 = vmul.f32 %v183, 0.3275911
  %v186 = vmul.f32 %v184, 0.3275911
  %v187 = vadd.f32 %v185, 1.0
  %v188 = vadd.f32 %v186, 1.0
  %v189 = vrcp.pop %v187
  %v190 = vrcp.pop %v188
  %v191 = vmul.f32 %v187, %v189
  %v192 = vmul.f32 %v188, %v190
  %v193 = vsub.f32 2.0, %v191
  %v194 = vsub.f32 2.0, %v192
  %v195 = vmul.f32 %v189, %v193
  %v196 = vmul.f32 %v190, %v194
  %v197 = vmul.f32 %v195, 1.0614054
  %v198 = vmul.f32 %v196, 1.0614054
  %v199 = vadd.f32 %v197, -1.4531521
  %v200 = vadd.f32 %v198, -1.4531521
  %v201 = vmul.f32 %v199, %v195
  %v202 = vmul.f32 %v200, %v196
  %v203 = vadd.f32 %v201, 1.4214138
  %v204 = vadd.f32 %v202, 1.4214138
  %v205 = vmul.f32 %v203, %v195
  %v206 = vmul.f32 %v204, %v196
  %v207 = vadd.f32 %v205, -0.28449672
  %v208 = vadd.f32 %v206, -0.28449672
  %v209 = vmul.f32 %v207, %v195
  %v210 = vmul.f32 %v208, %v196
  %v211 = vadd.f32 %v209, 0.2548296
  %v212 = vadd.f32 %v210, 0.2548296
  %v213 = vmul.f32 %v211, %v195
  %v214 = vmul.f32 %v212, %v196
  %v215 = vsub.f32 0.0, %v183
  %v216 = vsub.f32 0.0, %v184
  %v217 = vmul.f32 %v215, %v183
  %v218 = vmul.f32 %v216, %v184
  %v219 = vmul.f32 %v217, 1.442695
  %v220 = vpow.pop %v219
  %v221 = vmul.f32 %v218, 1.442695
  %v222 = vpow.pop %v221
  %v223 = vmul.f32 %v213, %v220
  %v224 = vmul.f32 %v214, %v222
  %v225 = vsub.f32 1.0, %v223
  %v226 = vsub.f32 1.0, %v224
  %v227 = vmul.f32 %v181, %v225
  %v228 = vmul.f32 %v182, %v226
  %v229 = vmul.f32 %v169, 0.5
  %v230 = vmul.f32 %v174, 0.5
  %v231 = vadd.f32 %v227, 1.0
  %v232 = vadd.f32 %v228, 1.0
  %v233 = vmul.f32 %v229, %v231
  %v234 = vmul.f32 %v230, %v232
  %v235 = vld [vmem:[#allocation3] sm:$0xff]
  %v236 = vld [vmem:[#allocation3 + $0x8] sm:$0xff]
  %v237 = vld [vmem:[%s5] sm:$0xff]
  %v238 = vld [vmem:[%s5 + $0x8] sm:$0xff]
  %v239 = vld [vmem:[%s5 + $0x10] sm:$0xff]
  %v240 = vld [vmem:[%s5 + $0x18] sm:$0xff]
  %v241 = vld [vmem:[%s5 + $0x20] sm:$0xff]
  %v242 = vld [vmem:[%s5 + $0x28] sm:$0xff]
  %v243 = vld [vmem:[%s5 + $0x30] sm:$0xff]
  %v244 = vld [vmem:[%s5 + $0x38] sm:$0xff]
  %vm245 = vcmask 523264
  %v247 = vsel %vm245, %v233, 0
  %v250 = vsel %vm245, %v234, 0
  %252 = vmatprep.subr.mxu0 0.0
  %253 = vmatpush1.msra.mxu0 %v237
  %254 = vmatprep.subr.mxu0 0.0
  %255 = vmatpush1.msra.mxu0 %v238
  %256 = vmatprep.subr.mxu0 0.0
  %257 = vmatpush1.msra.mxu0 %v239
  %258 = vmatprep.subr.mxu0 0.0
  %259 = vmatpush1.msra.mxu0 %v240
  %260 = vmatprep.subr.mxu0 0.0
  %261 = vmatpush1.msra.mxu0 %v241
  %262 = vmatprep.subr.mxu0 0.0
  %263 = vmatpush1.msra.mxu0 %v242
  %264 = vmatprep.subr.mxu0 0.0
  %265 = vmatpush1.msra.mxu0 %v243
  %266 = vmatprep.subr.mxu0 0.0
  %267 = vmatpush1.msra.mxu0 %v244
  %268 = vmatprep.subr.mxu0 0.0
  %269 = vmatpush1.msra.mxu0 0.0
  %270 = vmatprep.subr.mxu0 0.0
  %271 = vmatpush1.msra.mxu0 0.0
  %272 = vmatprep.subr.mxu0 0.0
  %273 = vmatpush1.msra.mxu0 0.0
  %274 = vmatprep.subr.mxu0 0.0
  %275 = vmatpush1.msra.mxu0 0.0
  %276 = vmatprep.subr.mxu0 0.0
  %277 = vmatpush1.msra.mxu0 0.0
  %278 = vmatprep.subr.mxu0 0.0
  %279 = vmatpush1.msra.mxu0 0.0
  %280 = vmatprep.subr.mxu0 0.0
  %281 = vmatpush1.msra.mxu0 0.0
  %282 = vmatprep.subr.mxu0 0.0
  %283 = vmatpush1.msra.mxu0 0.0
  %284 = vmatprep.subr.mxu0 0.0
  %285 = vmatpush1.msra.mxu0 0.0
  %286 = vmatprep.subr.mxu0 0.0
  %287 = vmatpush1.msra.mxu0 0.0
  %288 = vmatprep.subr.mxu0 0.0
  %289 = vmatpush1.msra.mxu0 0.0
  %290 = vmatprep.subr.mxu0 0.0
  %291 = vmatpush1.msra.mxu0 0.0
  %292 = vmatprep.subr.mxu0 0.0
  %293 = vmatpush1.msra.mxu0 0.0
  %294 = vmatprep.subr.mxu0 0.0
  %295 = vmatpush1.msra.mxu0 0.0
  %296 = vmatprep.subr.mxu0 0.0
  %297 = vmatpush1.msra.mxu0 0.0
  %298 = vmatprep.subr.mxu0 0.0
  %299 = vmatpush1.msra.mxu0 0.0
  %300 = vmatprep.subr.mxu0 0.0
  %301 = vmatpush1.msra.mxu0 0.0
  %302 = vmatprep.subr.mxu0 0.0
  %303 = vmatpush1.msra.mxu0 0.0
  %304 = vmatprep.subr.mxu0 0.0
  %305 = vmatpush1.msra.mxu0 0.0
  %306 = vmatprep.subr.mxu0 0.0
  %307 = vmatpush1.msra.mxu0 0.0
  %308 = vmatprep.subr.mxu0 0.0
  %309 = vmatpush1.msra.mxu0 0.0
  %310 = vmatprep.subr.mxu0 0.0
  %311 = vmatpush1.msra.mxu0 0.0
  %312 = vmatprep.subr.mxu0 0.0
  %313 = vmatpush1.msra.mxu0 0.0
  %314 = vmatprep.subr.mxu0 0.0
  %315 = vmatpush1.msra.mxu0 0.0
  %316 = vmatprep.mubr.f32.mxu0 0.0
  %317 = vmatmul.mubr.f32.gmra.mrb[0].mxu0 %v247
  %v318 = vpop.f32.mrb[0].mxu0
  %v319 = vadd.f32 0.0, %v318
  %v320 = vpop.f32.mrb[0].mxu0
  %321 = vmatprep.mubr.f32.mxu0 0.0
  %322 = vmatmul.mubr.f32.gmra.mrb[0].mxu0 %v250
  %v323 = vpop.f32.mrb[0].mxu0
  %v324 = vadd.f32 0.0, %v323
  %v325 = vpop.f32.mrb[0].mxu0
  %326 = vdwg.mxu0
  %v327 = vadd.f32 %v235, %v319
  %v328 = vadd.f32 %v236, %v324
  %329 = vst.msk [vmem:[#allocation3] sm:$0xff] %vm95, %v327
  %330 = vst.msk [vmem:[#allocation3 + $0x8] sm:$0xff] %vm95, %v328
  // Predicated region
  $region34: #{ssast_layer.7} parent=0 // pred_check
    %p331 = pneg %p26
  $region35: #{ssast_layer.7} parent=0 // pred_check_branch
    %333 = sbr.rel (%p331) target = $region37
  $region36: #{ssast_layer.7} parent=0 // pred_region
    %v334 = vld [vmem:[#allocation3] sm:$0xff]
    %v335 = vld [vmem:[#allocation3 + $0x8] sm:$0xff]
    %v336 = vld [vmem:[%s6] sm:$0x1]
    %v338 = vlaneseq
    %v339 = vshrl.u32 %v338, 7
    %v340 = vsub.s32 0, %v339
    %v341 = vrot.slane %v336, %v340
    %v343 = vadd.f32 %v334, %v341
    %v344 = vadd.f32 %v335, %v341
    %v345 = vld [vmem:[%s0] sm:$0xff]
    %v346 = vld [vmem:[%s0 + $0x8] sm:$0xff]
    %v347 = vadd.f32 %v343, %v345
    %v348 = vadd.f32 %v344, %v346
    %349 = vst.msk [vmem:[%s7] sm:$0xff] %vm95, %v347
    %350 = vst.msk [vmem:[%s7 + $0x8] sm:$0xff] %vm95, %v348
  $region37: #{ssast_layer.7} parent=0 // pred_fallthru
    _
  // Predicated region
  $region38: #{ssast_layer.7} parent=0 // pred_check
    _
  $region39: #{ssast_layer.7} parent=0 // pred_check_branch
    %352 = sbr.rel (0) target = $region41
  $region40: #{ssast_layer.7} parent=0 // pred_region
    _
  $region41: #{ssast_layer.7} parent=0 // pred_fallthru
    _
  // Predicated region
  $region42: #{ssast_layer.7} parent=0 // pred_check
    _
  $region43: #{ssast_layer.7} parent=0 // pred_check_branch
    %354 = sbr.rel (0) target = $region45
  $region44: #{ssast_layer.7} parent=0 // pred_region
    _
  $region45: #{ssast_layer.7} parent=0 // pred_fallthru
    _

</llo_original>
